<compile_context>
chip_gen: v6e
topology: v6e:2x2x1
jax: 0.10.0
libtpu: 0.0.40
codegen_flags: <defaults>
</compile_context>

<pallas_src>
import jax
import jax.numpy as jnp
from jax.experimental import pallas as pl
from jax.experimental.pallas import tpu as pltpu


def _hw_config():
    """(per-step VMEM budget, vmem_limit_bytes, keep >= 2 batch-grid steps)."""
    vmem_cap = None
    try:
        vmem_cap = int(pltpu.get_tpu_info().vmem_capacity_bytes)
    except Exception:
        vmem_cap = None
    if vmem_cap is not None and vmem_cap <= 96 * 1024 * 1024:
        # v7x-class: 64 MiB VMEM per TensorCore, 2 TensorCores per chip.
        return 14 * 1024 * 1024, 48 * 1024 * 1024, True
    # v5e / v6e: 128 MiB physical VMEM, single TensorCore.
    return 24 * 1024 * 1024, 64 * 1024 * 1024, False


def _choose_tiling(N, C, HW, HWp, elt_bytes, ks, budget, keep_two):
    """Images (bt) and channels (c_chunk) per grid step, sized against `budget`."""
    per_bt = (4 * HW * 4             # sum/max accumulators + conv acc/temp (f32)
              + 2 * HWp * 4          # zero-margined flat [avg, max] planes (f32)
              + 2 * HW * elt_bytes)  # double-buffered output block
    const = 2 * ks * HW * 4 + (2 << 20)   # column masks + bounded f32 upcast chunk

    def fits(bt, cc):
        return 2 * bt * cc * HW * elt_bytes + bt * per_bt + const <= budget

    bt_cap = N if not (keep_two and N >= 2) else max(1, (N + 1) // 2)
    bt_cap = min(bt_cap, 64)

    # Channels per step first (grows the per-step DMA without growing scratch):
    # all of C, else the largest multiple-of-8 divisor of C.
    bt0 = min(bt_cap, 8)
    cc_cands = [C] + [d for d in range(C - 1, 0, -1) if C % d == 0 and d % 8 == 0]
    cc = next((c for c in cc_cands if fits(bt0, c)),
              next((c for c in cc_cands if fits(1, c)), 1))

    # Images per step with the remaining budget; divisors of N avoid padded-batch
    # work, but padding is allowed when N's divisors are awkward (e.g. prime N).
    div_bt = next((b for b in range(bt_cap, 0, -1) if N % b == 0 and fits(b, cc)), 1)
    any_bt = next((b for b in range(bt_cap, 0, -1) if fits(b, cc)), 1)
    bt = div_bt if 2 * div_bt >= any_bt else any_bt
    return bt, cc


def spatial_attention(x, weight, kernel_size=7):
    """x: (N, C, H, W); weight: (1, 2, ks, ks) PyTorch conv weight. Returns (N, 1, H, W)."""
    assert kernel_size in (3, 7), "kernel size must be 3 or 7"
    ks = kernel_size
    pad = 3 if ks == 7 else 1
    N, C, H, W = x.shape
    HW = H * W

    # Flat-plane geometry: a conv tap is a constant lane offset (kh-pad)*W+(kw-pad),
    # bounded by +-M; the real data sits at a lane-aligned offset Ma inside a
    # zero-margined buffer of length HWp, so every tap read stays in bounds and
    # row-overflow taps read genuine zeros.
    M = pad * W + pad
    Ma = -(-M // 128) * 128
    HWp = Ma + HW + M

    budget, vmem_limit, keep_two = _hw_config()
    bt, c_chunk = _choose_tiling(N, C, HW, HWp, x.dtype.itemsize, ks, budget, keep_two)
    KC = C // c_chunk
    G = -(-N // bt)
    Np = G * bt
    inv_c = 1.0 / C

    # f32 upcast of the channel block is done in bounded sub-chunks (~2 MiB).
    csub = max(1, (2 << 20) // max(1, 4 * bt * HW))
    if csub >= 8:
        csub -= csub % 8
    csub = min(csub, c_chunk)

    # Per-kw column masks (evaluated at the *output* position): kill taps whose
    # source column w + (kw - pad) falls outside [0, W).
    col = jnp.arange(HW, dtype=jnp.int32) % W
    cmask = jnp.stack(
        [((col + (kw - pad) >= 0) & (col + (kw - pad) < W)).astype(jnp.float32)
         for kw in range(ks)])                                      # (ks, HW)

    xf = x.reshape(N, C, HW)
    if Np != N:
        xf = jnp.pad(xf, ((0, Np - N), (0, 0), (0, 0)))             # discarded tail

    def kernel(w_ref, cm_ref, x_ref, o_ref, sum_ref, max_ref, pf_ref):
        k = pl.program_id(1)

        @pl.when(k == 0)
        def _init():
            sum_ref[...] = jnp.zeros_like(sum_ref)
            max_ref[...] = jnp.full(max_ref.shape, -jnp.inf, max_ref.dtype)

        # Lane-dense running channel reduction (f32 upcast in bounded chunks).
        for s0 in range(0, c_chunk, csub):
            s1 = min(s0 + csub, c_chunk)
            xs = x_ref[:, s0:s1, :].astype(jnp.float32)             # (bt, csub, HW)
            sum_ref[...] = sum_ref[...] + jnp.sum(xs, axis=1)
            max_ref[...] = jnp.maximum(max_ref[...], jnp.max(xs, axis=1))

        @pl.when(k == KC - 1)
        def _finalize():
            # Zero-margined flat [avg, max] planes (data region lane-aligned at Ma).
            pf_ref[...] = jnp.zeros_like(pf_ref)
            pf_ref[0, :, Ma:Ma + HW] = sum_ref[...] * inv_c
            pf_ref[1, :, Ma:Ma + HW] = max_ref[...]

            # Hoist the 2*ks*ks scalar weight reads and the column masks.
            wts = [w_ref[i] for i in range(2 * ks * ks)]
            cm = cm_ref[...]                                        # (ks, HW)

            acc = jnp.zeros((bt, HW), jnp.float32)
            for ch in range(2):
                for kw in range(ks):
                    dw = kw - pad
                    t = None
                    for kh in range(ks):
                        start = Ma + (kh - pad) * W + dw
                        v = wts[ch * ks * ks + kh * ks + kw] * pf_ref[ch, :, start:start + HW]
                        t = v if t is None else t + v
                    if dw == 0:
                        acc = acc + t                               # center column: mask == 1
                    else:
                        acc = acc + t * cm[kw:kw + 1, :]
            o_ref[...] = jax.nn.sigmoid(acc).astype(o_ref.dtype)

    out = pl.pallas_call(
        kernel,
        out_shape=jax.ShapeDtypeStruct((G, bt, HW), x.dtype),
        grid=(G, KC),
        in_specs=[
            pl.BlockSpec(memory_space=pltpu.MemorySpace.SMEM),            # conv weights
            pl.BlockSpec((ks, HW), lambda g, k: (0, 0)),                  # column masks
            pl.BlockSpec((bt, c_chunk, HW), lambda g, k: (g, k, 0)),      # x, flattened spatial
        ],
        out_specs=pl.BlockSpec((None, bt, HW), lambda g, k: (g, 0, 0)),
        scratch_shapes=[
            pltpu.VMEM((bt, HW), jnp.float32),        # running channel sum
            pltpu.VMEM((bt, HW), jnp.float32),        # running channel max
            pltpu.VMEM((2, bt, HWp), jnp.float32),    # zero-margined flat [avg, max]
        ],
        compiler_params=pltpu.CompilerParams(
            dimension_semantics=("parallel", "arbitrary"),
            vmem_limit_bytes=vmem_limit,
        ),
    )(weight.reshape(-1).astype(jnp.float32), cmask, xf)

    # Free rearranges only: drop padded batch rows and restore NCHW.
    return out.reshape(Np, HW)[:N].reshape(N, 1, H, W)


if __name__ == "__main__":
    key = jax.random.PRNGKey(0)
    kx, kw = jax.random.split(key)

    N, C, H, W = 2, 4, 16, 16
    x = jax.random.normal(kx, (N, C, H, W), dtype=jnp.float32)

    # Conv weight for nn.Conv2d(2, 1, 7, bias=False), PyTorch-style uniform init.
    ks = 7
    fan_in = 2 * ks * ks
    bound = 1.0 / (fan_in ** 0.5)
    weight = jax.random.uniform(kw, (1, 2, ks, ks), jnp.float32, -bound, bound)

    out = jax.block_until_ready(spatial_attention(x, weight))

    # Pure-JAX reference for correctness.
    avg = jnp.mean(x, axis=1, keepdims=True)
    mx = jnp.max(x, axis=1, keepdims=True)
    cat = jnp.concatenate([avg, mx], axis=1)
    ref = jax.lax.conv_general_dilated(
        cat, weight, window_strides=(1, 1),
        padding=((3, 3), (3, 3)),
        dimension_numbers=("NCHW", "OIHW", "NCHW"))
    ref = jax.nn.sigmoid(ref)

    assert out.shape == (N, 1, H, W)
    err = float(jnp.max(jnp.abs(out - ref)))
    assert jnp.allclose(out, ref, atol=2e-5, rtol=2e-5), err
    print("KERNEL_OK")
</pallas_src>

<mosaic_0001>
module attributes {stable_mosaic.version = 11 : i64} {
  func.func @kernel(%arg0: i32, %arg1: i32, %arg2: memref<98xf32, #tpu.memory_space<smem>>, %arg3: memref<7x256xf32, #tpu.memory_space<vmem>>, %arg4: memref<2x4x256xf32, #tpu.memory_space<vmem>>, %arg5: memref<1x2x256xf32, #tpu.memory_space<vmem>>, %arg6: memref<2x256xf32, #tpu.memory_space<vmem>>, %arg7: memref<2x256xf32, #tpu.memory_space<vmem>>, %arg8: memref<2x2x435xf32, #tpu.memory_space<vmem>>) attributes {dimension_semantics = [#tpu.dimension_semantics<parallel>, #tpu.dimension_semantics<arbitrary>], iteration_bounds = array<i64: 1, 1>, scalar_prefetch = 0 : i64, scratch_operands = 3 : i64, tpu.core_type = #tpu.core_type<tc>, window_params = [{transform_indices = @transform_0, window_bounds = array<i64: 98>}, {pipeline_mode = #tpu.pipeline_mode<synchronous>, transform_indices = @transform_1, window_bounds = array<i64: 7, 256>}, {transform_indices = @transform_2, window_bounds = array<i64: 2, 4, 256>}, {transform_indices = @transform_3, window_bounds = array<i64: 1, 2, 256>}]} {
    %c0_i32 = arith.constant 0 : i32
    %0 = arith.cmpi eq, %arg1, %c0_i32 : i32
    %1 = arith.extui %0 : i1 to i32
    %c0_i32_0 = arith.constant 0 : i32
    %2 = arith.cmpi ne, %1, %c0_i32_0 : i32
    scf.if %2 {
      %cst_14 = arith.constant 0.000000e+00 : f32
      %15 = vector.broadcast %cst_14 : f32 to vector<2x256xf32>
      %c0_15 = arith.constant 0 : index
      %c0_16 = arith.constant 0 : index
      %16 = vector.load %arg6[%c0_15, %c0_16] : memref<2x256xf32, #tpu.memory_space<vmem>>, vector<2x256xf32>
      tpu.vector_store %arg6[%c0_15, %c0_16], %15 {strides = array<i32>} : memref<2x256xf32, #tpu.memory_space<vmem>>, vector<2x256xf32>,
      %cst_17 = arith.constant 0xFF800000 : f32
      %17 = vector.broadcast %cst_17 : f32 to vector<2x256xf32>
      %c0_18 = arith.constant 0 : index
      %c0_19 = arith.constant 0 : index
      %18 = vector.load %arg7[%c0_18, %c0_19] : memref<2x256xf32, #tpu.memory_space<vmem>>, vector<2x256xf32>
      tpu.vector_store %arg7[%c0_18, %c0_19], %17 {strides = array<i32>} : memref<2x256xf32, #tpu.memory_space<vmem>>, vector<2x256xf32>,
    } else {
    }
    %c0 = arith.constant 0 : index
    %c0_1 = arith.constant 0 : index
    %c0_2 = arith.constant 0 : index
    %3 = vector.load %arg4[%c0, %c0_1, %c0_2] : memref<2x4x256xf32, #tpu.memory_space<vmem>>, vector<2x4x256xf32>
    %c0_3 = arith.constant 0 : index
    %c0_4 = arith.constant 0 : index
    %4 = vector.load %arg6[%c0_3, %c0_4] : memref<2x256xf32, #tpu.memory_space<vmem>>, vector<2x256xf32>
    %cst = arith.constant dense<0.000000e+00> : vector<2x256xf32>
    %5 = vector.multi_reduction <add>, %3, %cst [1] : vector<2x4x256xf32> to vector<2x256xf32>
    %6 = arith.addf %4, %5 : vector<2x256xf32>
    %c0_5 = arith.constant 0 : index
    %c0_6 = arith.constant 0 : index
    %7 = vector.load %arg6[%c0_5, %c0_6] : memref<2x256xf32, #tpu.memory_space<vmem>>, vector<2x256xf32>
    tpu.vector_store %arg6[%c0_5, %c0_6], %6 {strides = array<i32>} : memref<2x256xf32, #tpu.memory_space<vmem>>, vector<2x256xf32>,
    %c0_7 = arith.constant 0 : index
    %c0_8 = arith.constant 0 : index
    %8 = vector.load %arg7[%c0_7, %c0_8] : memref<2x256xf32, #tpu.memory_space<vmem>>, vector<2x256xf32>
    %cst_9 = arith.constant dense<0xFF800000> : vector<2x256xf32>
    %9 = vector.multi_reduction <maximumf>, %3, %cst_9 [1] : vector<2x4x256xf32> to vector<2x256xf32>
    %10 = arith.maximumf %8, %9 : vector<2x256xf32>
    %c0_10 = arith.constant 0 : index
    %c0_11 = arith.constant 0 : index
    %11 = vector.load %arg7[%c0_10, %c0_11] : memref<2x256xf32, #tpu.memory_space<vmem>>, vector<2x256xf32>
    tpu.vector_store %arg7[%c0_10, %c0_11], %10 {strides = array<i32>} : memref<2x256xf32, #tpu.memory_space<vmem>>, vector<2x256xf32>,
    %c0_i32_12 = arith.constant 0 : i32
    %12 = arith.cmpi eq, %arg1, %c0_i32_12 : i32
    %13 = arith.extui %12 : i1 to i32
    %c0_i32_13 = arith.constant 0 : i32
    %14 = arith.cmpi ne, %13, %c0_i32_13 : i32
    scf.if %14 {
      %cst_14 = arith.constant 0.000000e+00 : f32
      %15 = vector.broadcast %cst_14 : f32 to vector<2x2x435xf32>
      %c0_15 = arith.constant 0 : index
      %c0_16 = arith.constant 0 : index
      %c0_17 = arith.constant 0 : index
      %16 = vector.load %arg8[%c0_15, %c0_16, %c0_17] : memref<2x2x435xf32, #tpu.memory_space<vmem>>, vector<2x2x435xf32>
      tpu.vector_store %arg8[%c0_15, %c0_16, %c0_17], %15 {strides = array<i32>} : memref<2x2x435xf32, #tpu.memory_space<vmem>>, vector<2x2x435xf32>,
      %c0_18 = arith.constant 0 : index
      %c0_19 = arith.constant 0 : index
      %17 = vector.load %arg6[%c0_18, %c0_19] : memref<2x256xf32, #tpu.memory_space<vmem>>, vector<2x256xf32>
      %cst_20 = arith.constant 2.500000e-01 : f32
      %18 = vector.broadcast %cst_20 : f32 to vector<2x256xf32>
      %19 = arith.mulf %17, %18 : vector<2x256xf32>
      %c0_21 = arith.constant 0 : index
      %c0_22 = arith.constant 0 : index
      %c128 = arith.constant 128 : index
      %20 = vector.load %arg8[%c0_21, %c0_22, %c128] : memref<2x2x435xf32, #tpu.memory_space<vmem>>, vector<1x2x256xf32>
      %21 = vector.shape_cast %20 : vector<1x2x256xf32> to vector<2x256xf32>
      %22 = vector.shape_cast %19 : vector<2x256xf32> to vector<1x2x256xf32>
      tpu.vector_store %arg8[%c0_21, %c0_22, %c128], %22 {strides = array<i32>} : memref<2x2x435xf32, #tpu.memory_space<vmem>>, vector<1x2x256xf32>,
      %c0_23 = arith.constant 0 : index
      %c0_24 = arith.constant 0 : index
      %23 = vector.load %arg7[%c0_23, %c0_24] : memref<2x256xf32, #tpu.memory_space<vmem>>, vector<2x256xf32>
      %c1 = arith.constant 1 : index
      %c0_25 = arith.constant 0 : index
      %c128_26 = arith.constant 128 : index
      %24 = vector.load %arg8[%c1, %c0_25, %c128_26] : memref<2x2x435xf32, #tpu.memory_space<vmem>>, vector<1x2x256xf32>
      %25 = vector.shape_cast %24 : vector<1x2x256xf32> to vector<2x256xf32>
      %26 = vector.shape_cast %23 : vector<2x256xf32> to vector<1x2x256xf32>
      tpu.vector_store %arg8[%c1, %c0_25, %c128_26], %26 {strides = array<i32>} : memref<2x2x435xf32, #tpu.memory_space<vmem>>, vector<1x2x256xf32>,
      %c0_27 = arith.constant 0 : index
      %27 = memref.load %arg2[%c0_27] : memref<98xf32, #tpu.memory_space<smem>>
      %c1_28 = arith.constant 1 : index
      %28 = memref.load %arg2[%c1_28] : memref<98xf32, #tpu.memory_space<smem>>
      %c2 = arith.constant 2 : index
      %29 = memref.load %arg2[%c2] : memref<98xf32, #tpu.memory_space<smem>>
      %c3 = arith.constant 3 : index
      %30 = memref.load %arg2[%c3] : memref<98xf32, #tpu.memory_space<smem>>
      %c4 = arith.constant 4 : index
      %31 = memref.load %arg2[%c4] : memref<98xf32, #tpu.memory_space<smem>>
      %c5 = arith.constant 5 : index
      %32 = memref.load %arg2[%c5] : memref<98xf32, #tpu.memory_space<smem>>
      %c6 = arith.constant 6 : index
      %33 = memref.load %arg2[%c6] : memref<98xf32, #tpu.memory_space<smem>>
      %c7 = arith.constant 7 : index
      %34 = memref.load %arg2[%c7] : memref<98xf32, #tpu.memory_space<smem>>
      %c8 = arith.constant 8 : index
      %35 = memref.load %arg2[%c8] : memref<98xf32, #tpu.memory_space<smem>>
      %c9 = arith.constant 9 : index
      %36 = memref.load %arg2[%c9] : memref<98xf32, #tpu.memory_space<smem>>
      %c10 = arith.constant 10 : index
      %37 = memref.load %arg2[%c10] : memref<98xf32, #tpu.memory_space<smem>>
      %c11 = arith.constant 11 : index
      %38 = memref.load %arg2[%c11] : memref<98xf32, #tpu.memory_space<smem>>
      %c12 = arith.constant 12 : index
      %39 = memref.load %arg2[%c12] : memref<98xf32, #tpu.memory_space<smem>>
      %c13 = arith.constant 13 : index
      %40 = memref.load %arg2[%c13] : memref<98xf32, #tpu.memory_space<smem>>
      %c14 = arith.constant 14 : index
      %41 = memref.load %arg2[%c14] : memref<98xf32, #tpu.memory_space<smem>>
      %c15 = arith.constant 15 : index
      %42 = memref.load %arg2[%c15] : memref<98xf32, #tpu.memory_space<smem>>
      %c16 = arith.constant 16 : index
      %43 = memref.load %arg2[%c16] : memref<98xf32, #tpu.memory_space<smem>>
      %c17 = arith.constant 17 : index
      %44 = memref.load %arg2[%c17] : memref<98xf32, #tpu.memory_space<smem>>
      %c18 = arith.constant 18 : index
      %45 = memref.load %arg2[%c18] : memref<98xf32, #tpu.memory_space<smem>>
      %c19 = arith.constant 19 : index
      %46 = memref.load %arg2[%c19] : memref<98xf32, #tpu.memory_space<smem>>
      %c20 = arith.constant 20 : index
      %47 = memref.load %arg2[%c20] : memref<98xf32, #tpu.memory_space<smem>>
      %c21 = arith.constant 21 : index
      %48 = memref.load %arg2[%c21] : memref<98xf32, #tpu.memory_space<smem>>
      %c22 = arith.constant 22 : index
      %49 = memref.load %arg2[%c22] : memref<98xf32, #tpu.memory_space<smem>>
      %c23 = arith.constant 23 : index
      %50 = memref.load %arg2[%c23] : memref<98xf32, #tpu.memory_space<smem>>
      %c24 = arith.constant 24 : index
      %51 = memref.load %arg2[%c24] : memref<98xf32, #tpu.memory_space<smem>>
      %c25 = arith.constant 25 : index
      %52 = memref.load %arg2[%c25] : memref<98xf32, #tpu.memory_space<smem>>
      %c26 = arith.constant 26 : index
      %53 = memref.load %arg2[%c26] : memref<98xf32, #tpu.memory_space<smem>>
      %c27 = arith.constant 27 : index
      %54 = memref.load %arg2[%c27] : memref<98xf32, #tpu.memory_space<smem>>
      %c28 = arith.constant 28 : index
      %55 = memref.load %arg2[%c28] : memref<98xf32, #tpu.memory_space<smem>>
      %c29 = arith.constant 29 : index
      %56 = memref.load %arg2[%c29] : memref<98xf32, #tpu.memory_space<smem>>
      %c30 = arith.constant 30 : index
      %57 = memref.load %arg2[%c30] : memref<98xf32, #tpu.memory_space<smem>>
      %c31 = arith.constant 31 : index
      %58 = memref.load %arg2[%c31] : memref<98xf32, #tpu.memory_space<smem>>
      %c32 = arith.constant 32 : index
      %59 = memref.load %arg2[%c32] : memref<98xf32, #tpu.memory_space<smem>>
      %c33 = arith.constant 33 : index
      %60 = memref.load %arg2[%c33] : memref<98xf32, #tpu.memory_space<smem>>
      %c34 = arith.constant 34 : index
      %61 = memref.load %arg2[%c34] : memref<98xf32, #tpu.memory_space<smem>>
      %c35 = arith.constant 35 : index
      %62 = memref.load %arg2[%c35] : memref<98xf32, #tpu.memory_space<smem>>
      %c36 = arith.constant 36 : index
      %63 = memref.load %arg2[%c36] : memref<98xf32, #tpu.memory_space<smem>>
      %c37 = arith.constant 37 : index
      %64 = memref.load %arg2[%c37] : memref<98xf32, #tpu.memory_space<smem>>
      %c38 = arith.constant 38 : index
      %65 = memref.load %arg2[%c38] : memref<98xf32, #tpu.memory_space<smem>>
      %c39 = arith.constant 39 : index
      %66 = memref.load %arg2[%c39] : memref<98xf32, #tpu.memory_space<smem>>
      %c40 = arith.constant 40 : index
      %67 = memref.load %arg2[%c40] : memref<98xf32, #tpu.memory_space<smem>>
      %c41 = arith.constant 41 : index
      %68 = memref.load %arg2[%c41] : memref<98xf32, #tpu.memory_space<smem>>
      %c42 = arith.constant 42 : index
      %69 = memref.load %arg2[%c42] : memref<98xf32, #tpu.memory_space<smem>>
      %c43 = arith.constant 43 : index
      %70 = memref.load %arg2[%c43] : memref<98xf32, #tpu.memory_space<smem>>
      %c44 = arith.constant 44 : index
      %71 = memref.load %arg2[%c44] : memref<98xf32, #tpu.memory_space<smem>>
      %c45 = arith.constant 45 : index
      %72 = memref.load %arg2[%c45] : memref<98xf32, #tpu.memory_space<smem>>
      %c46 = arith.constant 46 : index
      %73 = memref.load %arg2[%c46] : memref<98xf32, #tpu.memory_space<smem>>
      %c47 = arith.constant 47 : index
      %74 = memref.load %arg2[%c47] : memref<98xf32, #tpu.memory_space<smem>>
      %c48 = arith.constant 48 : index
      %75 = memref.load %arg2[%c48] : memref<98xf32, #tpu.memory_space<smem>>
      %c49 = arith.constant 49 : index
      %76 = memref.load %arg2[%c49] : memref<98xf32, #tpu.memory_space<smem>>
      %c50 = arith.constant 50 : index
      %77 = memref.load %arg2[%c50] : memref<98xf32, #tpu.memory_space<smem>>
      %c51 = arith.constant 51 : index
      %78 = memref.load %arg2[%c51] : memref<98xf32, #tpu.memory_space<smem>>
      %c52 = arith.constant 52 : index
      %79 = memref.load %arg2[%c52] : memref<98xf32, #tpu.memory_space<smem>>
      %c53 = arith.constant 53 : index
      %80 = memref.load %arg2[%c53] : memref<98xf32, #tpu.memory_space<smem>>
      %c54 = arith.constant 54 : index
      %81 = memref.load %arg2[%c54] : memref<98xf32, #tpu.memory_space<smem>>
      %c55 = arith.constant 55 : index
      %82 = memref.load %arg2[%c55] : memref<98xf32, #tpu.memory_space<smem>>
      %c56 = arith.constant 56 : index
      %83 = memref.load %arg2[%c56] : memref<98xf32, #tpu.memory_space<smem>>
      %c57 = arith.constant 57 : index
      %84 = memref.load %arg2[%c57] : memref<98xf32, #tpu.memory_space<smem>>
      %c58 = arith.constant 58 : index
      %85 = memref.load %arg2[%c58] : memref<98xf32, #tpu.memory_space<smem>>
      %c59 = arith.constant 59 : index
      %86 = memref.load %arg2[%c59] : memref<98xf32, #tpu.memory_space<smem>>
      %c60 = arith.constant 60 : index
      %87 = memref.load %arg2[%c60] : memref<98xf32, #tpu.memory_space<smem>>
      %c61 = arith.constant 61 : index
      %88 = memref.load %arg2[%c61] : memref<98xf32, #tpu.memory_space<smem>>
      %c62 = arith.constant 62 : index
      %89 = memref.load %arg2[%c62] : memref<98xf32, #tpu.memory_space<smem>>
      %c63 = arith.constant 63 : index
      %90 = memref.load %arg2[%c63] : memref<98xf32, #tpu.memory_space<smem>>
      %c64 = arith.constant 64 : index
      %91 = memref.load %arg2[%c64] : memref<98xf32, #tpu.memory_space<smem>>
      %c65 = arith.constant 65 : index
      %92 = memref.load %arg2[%c65] : memref<98xf32, #tpu.memory_space<smem>>
      %c66 = arith.constant 66 : index
      %93 = memref.load %arg2[%c66] : memref<98xf32, #tpu.memory_space<smem>>
      %c67 = arith.constant 67 : index
      %94 = memref.load %arg2[%c67] : memref<98xf32, #tpu.memory_space<smem>>
      %c68 = arith.constant 68 : index
      %95 = memref.load %arg2[%c68] : memref<98xf32, #tpu.memory_space<smem>>
      %c69 = arith.constant 69 : index
      %96 = memref.load %arg2[%c69] : memref<98xf32, #tpu.memory_space<smem>>
      %c70 = arith.constant 70 : index
      %97 = memref.load %arg2[%c70] : memref<98xf32, #tpu.memory_space<smem>>
      %c71 = arith.constant 71 : index
      %98 = memref.load %arg2[%c71] : memref<98xf32, #tpu.memory_space<smem>>
      %c72 = arith.constant 72 : index
      %99 = memref.load %arg2[%c72] : memref<98xf32, #tpu.memory_space<smem>>
      %c73 = arith.constant 73 : index
      %100 = memref.load %arg2[%c73] : memref<98xf32, #tpu.memory_space<smem>>
      %c74 = arith.constant 74 : index
      %101 = memref.load %arg2[%c74] : memref<98xf32, #tpu.memory_space<smem>>
      %c75 = arith.constant 75 : index
      %102 = memref.load %arg2[%c75] : memref<98xf32, #tpu.memory_space<smem>>
      %c76 = arith.constant 76 : index
      %103 = memref.load %arg2[%c76] : memref<98xf32, #tpu.memory_space<smem>>
      %c77 = arith.constant 77 : index
      %104 = memref.load %arg2[%c77] : memref<98xf32, #tpu.memory_space<smem>>
      %c78 = arith.constant 78 : index
      %105 = memref.load %arg2[%c78] : memref<98xf32, #tpu.memory_space<smem>>
      %c79 = arith.constant 79 : index
      %106 = memref.load %arg2[%c79] : memref<98xf32, #tpu.memory_space<smem>>
      %c80 = arith.constant 80 : index
      %107 = memref.load %arg2[%c80] : memref<98xf32, #tpu.memory_space<smem>>
      %c81 = arith.constant 81 : index
      %108 = memref.load %arg2[%c81] : memref<98xf32, #tpu.memory_space<smem>>
      %c82 = arith.constant 82 : index
      %109 = memref.load %arg2[%c82] : memref<98xf32, #tpu.memory_space<smem>>
      %c83 = arith.constant 83 : index
      %110 = memref.load %arg2[%c83] : memref<98xf32, #tpu.memory_space<smem>>
      %c84 = arith.constant 84 : index
      %111 = memref.load %arg2[%c84] : memref<98xf32, #tpu.memory_space<smem>>
      %c85 = arith.constant 85 : index
      %112 = memref.load %arg2[%c85] : memref<98xf32, #tpu.memory_space<smem>>
      %c86 = arith.constant 86 : index
      %113 = memref.load %arg2[%c86] : memref<98xf32, #tpu.memory_space<smem>>
      %c87 = arith.constant 87 : index
      %114 = memref.load %arg2[%c87] : memref<98xf32, #tpu.memory_space<smem>>
      %c88 = arith.constant 88 : index
      %115 = memref.load %arg2[%c88] : memref<98xf32, #tpu.memory_space<smem>>
      %c89 = arith.constant 89 : index
      %116 = memref.load %arg2[%c89] : memref<98xf32, #tpu.memory_space<smem>>
      %c90 = arith.constant 90 : index
      %117 = memref.load %arg2[%c90] : memref<98xf32, #tpu.memory_space<smem>>
      %c91 = arith.constant 91 : index
      %118 = memref.load %arg2[%c91] : memref<98xf32, #tpu.memory_space<smem>>
      %c92 = arith.constant 92 : index
      %119 = memref.load %arg2[%c92] : memref<98xf32, #tpu.memory_space<smem>>
      %c93 = arith.constant 93 : index
      %120 = memref.load %arg2[%c93] : memref<98xf32, #tpu.memory_space<smem>>
      %c94 = arith.constant 94 : index
      %121 = memref.load %arg2[%c94] : memref<98xf32, #tpu.memory_space<smem>>
      %c95 = arith.constant 95 : index
      %122 = memref.load %arg2[%c95] : memref<98xf32, #tpu.memory_space<smem>>
      %c96 = arith.constant 96 : index
      %123 = memref.load %arg2[%c96] : memref<98xf32, #tpu.memory_space<smem>>
      %c97 = arith.constant 97 : index
      %124 = memref.load %arg2[%c97] : memref<98xf32, #tpu.memory_space<smem>>
      %c0_29 = arith.constant 0 : index
      %c0_30 = arith.constant 0 : index
      %125 = vector.load %arg3[%c0_29, %c0_30] : memref<7x256xf32, #tpu.memory_space<vmem>>, vector<7x256xf32>
      %cst_31 = arith.constant 0.000000e+00 : f32
      %126 = vector.broadcast %cst_31 : f32 to vector<2x256xf32>
      %c0_32 = arith.constant 0 : index
      %c0_33 = arith.constant 0 : index
      %c77_34 = arith.constant 77 : index
      %127 = vector.load %arg8[%c0_32, %c0_33, %c77_34] : memref<2x2x435xf32, #tpu.memory_space<vmem>>, vector<1x2x256xf32>
      %128 = vector.shape_cast %127 : vector<1x2x256xf32> to vector<2x256xf32>
      %129 = vector.broadcast %27 : f32 to vector<2x256xf32>
      %130 = arith.mulf %129, %128 : vector<2x256xf32>
      %c0_35 = arith.constant 0 : index
      %c0_36 = arith.constant 0 : index
      %c93_37 = arith.constant 93 : index
      %131 = vector.load %arg8[%c0_35, %c0_36, %c93_37] : memref<2x2x435xf32, #tpu.memory_space<vmem>>, vector<1x2x256xf32>
      %132 = vector.shape_cast %131 : vector<1x2x256xf32> to vector<2x256xf32>
      %133 = vector.broadcast %34 : f32 to vector<2x256xf32>
      %134 = arith.mulf %133, %132 : vector<2x256xf32>
      %135 = arith.addf %130, %134 : vector<2x256xf32>
      %c0_38 = arith.constant 0 : index
      %c0_39 = arith.constant 0 : index
      %c109 = arith.constant 109 : index
      %136 = vector.load %arg8[%c0_38, %c0_39, %c109] : memref<2x2x435xf32, #tpu.memory_space<vmem>>, vector<1x2x256xf32>
      %137 = vector.shape_cast %136 : vector<1x2x256xf32> to vector<2x256xf32>
      %138 = vector.broadcast %41 : f32 to vector<2x256xf32>
      %139 = arith.mulf %138, %137 : vector<2x256xf32>
      %140 = arith.addf %135, %139 : vector<2x256xf32>
      %c0_40 = arith.constant 0 : index
      %c0_41 = arith.constant 0 : index
      %c125 = arith.constant 125 : index
      %141 = vector.load %arg8[%c0_40, %c0_41, %c125] : memref<2x2x435xf32, #tpu.memory_space<vmem>>, vector<1x2x256xf32>
      %142 = vector.shape_cast %141 : vector<1x2x256xf32> to vector<2x256xf32>
      %143 = vector.broadcast %48 : f32 to vector<2x256xf32>
      %144 = arith.mulf %143, %142 : vector<2x256xf32>
      %145 = arith.addf %140, %144 : vector<2x256xf32>
      %c0_42 = arith.constant 0 : index
      %c0_43 = arith.constant 0 : index
      %c141 = arith.constant 141 : index
      %146 = vector.load %arg8[%c0_42, %c0_43, %c141] : memref<2x2x435xf32, #tpu.memory_space<vmem>>, vector<1x2x256xf32>
      %147 = vector.shape_cast %146 : vector<1x2x256xf32> to vector<2x256xf32>
      %148 = vector.broadcast %55 : f32 to vector<2x256xf32>
      %149 = arith.mulf %148, %147 : vector<2x256xf32>
      %150 = arith.addf %145, %149 : vector<2x256xf32>
      %c0_44 = arith.constant 0 : index
      %c0_45 = arith.constant 0 : index
      %c157 = arith.constant 157 : index
      %151 = vector.load %arg8[%c0_44, %c0_45, %c157] : memref<2x2x435xf32, #tpu.memory_space<vmem>>, vector<1x2x256xf32>
      %152 = vector.shape_cast %151 : vector<1x2x256xf32> to vector<2x256xf32>
      %153 = vector.broadcast %62 : f32 to vector<2x256xf32>
      %154 = arith.mulf %153, %152 : vector<2x256xf32>
      %155 = arith.addf %150, %154 : vector<2x256xf32>
      %c0_46 = arith.constant 0 : index
      %c0_47 = arith.constant 0 : index
      %c173 = arith.constant 173 : index
      %156 = vector.load %arg8[%c0_46, %c0_47, %c173] : memref<2x2x435xf32, #tpu.memory_space<vmem>>, vector<1x2x256xf32>
      %157 = vector.shape_cast %156 : vector<1x2x256xf32> to vector<2x256xf32>
      %158 = vector.broadcast %69 : f32 to vector<2x256xf32>
      %159 = arith.mulf %158, %157 : vector<2x256xf32>
      %160 = arith.addf %155, %159 : vector<2x256xf32>
      %161 = vector.extract_strided_slice %125 {offsets = [0, 0], sizes = [1, 256], strides = [1, 1]} : vector<7x256xf32> to vector<1x256xf32>
      %162 = vector.broadcast %161 : vector<1x256xf32> to vector<2x256xf32>
      %163 = arith.mulf %160, %162 : vector<2x256xf32>
      %164 = arith.addf %126, %163 : vector<2x256xf32>
      %c0_48 = arith.constant 0 : index
      %c0_49 = arith.constant 0 : index
      %c78_50 = arith.constant 78 : index
      %165 = vector.load %arg8[%c0_48, %c0_49, %c78_50] : memref<2x2x435xf32, #tpu.memory_space<vmem>>, vector<1x2x256xf32>
      %166 = vector.shape_cast %165 : vector<1x2x256xf32> to vector<2x256xf32>
      %167 = vector.broadcast %28 : f32 to vector<2x256xf32>
      %168 = arith.mulf %167, %166 : vector<2x256xf32>
      %c0_51 = arith.constant 0 : index
      %c0_52 = arith.constant 0 : index
      %c94_53 = arith.constant 94 : index
      %169 = vector.load %arg8[%c0_51, %c0_52, %c94_53] : memref<2x2x435xf32, #tpu.memory_space<vmem>>, vector<1x2x256xf32>
      %170 = vector.shape_cast %169 : vector<1x2x256xf32> to vector<2x256xf32>
      %171 = vector.broadcast %35 : f32 to vector<2x256xf32>
      %172 = arith.mulf %171, %170 : vector<2x256xf32>
      %173 = arith.addf %168, %172 : vector<2x256xf32>
      %c0_54 = arith.constant 0 : index
      %c0_55 = arith.constant 0 : index
      %c110 = arith.constant 110 : index
      %174 = vector.load %arg8[%c0_54, %c0_55, %c110] : memref<2x2x435xf32, #tpu.memory_space<vmem>>, vector<1x2x256xf32>
      %175 = vector.shape_cast %174 : vector<1x2x256xf32> to vector<2x256xf32>
      %176 = vector.broadcast %42 : f32 to vector<2x256xf32>
      %177 = arith.mulf %176, %175 : vector<2x256xf32>
      %178 = arith.addf %173, %177 : vector<2x256xf32>
      %c0_56 = arith.constant 0 : index
      %c0_57 = arith.constant 0 : index
      %c126 = arith.constant 126 : index
      %179 = vector.load %arg8[%c0_56, %c0_57, %c126] : memref<2x2x435xf32, #tpu.memory_space<vmem>>, vector<1x2x256xf32>
      %180 = vector.shape_cast %179 : vector<1x2x256xf32> to vector<2x256xf32>
      %181 = vector.broadcast %49 : f32 to vector<2x256xf32>
      %182 = arith.mulf %181, %180 : vector<2x256xf32>
      %183 = arith.addf %178, %182 : vector<2x256xf32>
      %c0_58 = arith.constant 0 : index
      %c0_59 = arith.constant 0 : index
      %c142 = arith.constant 142 : index
      %184 = vector.load %arg8[%c0_58, %c0_59, %c142] : memref<2x2x435xf32, #tpu.memory_space<vmem>>, vector<1x2x256xf32>
      %185 = vector.shape_cast %184 : vector<1x2x256xf32> to vector<2x256xf32>
      %186 = vector.broadcast %56 : f32 to vector<2x256xf32>
      %187 = arith.mulf %186, %185 : vector<2x256xf32>
      %188 = arith.addf %183, %187 : vector<2x256xf32>
      %c0_60 = arith.constant 0 : index
      %c0_61 = arith.constant 0 : index
      %c158 = arith.constant 158 : index
      %189 = vector.load %arg8[%c0_60, %c0_61, %c158] : memref<2x2x435xf32, #tpu.memory_space<vmem>>, vector<1x2x256xf32>
      %190 = vector.shape_cast %189 : vector<1x2x256xf32> to vector<2x256xf32>
      %191 = vector.broadcast %63 : f32 to vector<2x256xf32>
      %192 = arith.mulf %191, %190 : vector<2x256xf32>
      %193 = arith.addf %188, %192 : vector<2x256xf32>
      %c0_62 = arith.constant 0 : index
      %c0_63 = arith.constant 0 : index
      %c174 = arith.constant 174 : index
      %194 = vector.load %arg8[%c0_62, %c0_63, %c174] : memref<2x2x435xf32, #tpu.memory_space<vmem>>, vector<1x2x256xf32>
      %195 = vector.shape_cast %194 : vector<1x2x256xf32> to vector<2x256xf32>
      %196 = vector.broadcast %70 : f32 to vector<2x256xf32>
      %197 = arith.mulf %196, %195 : vector<2x256xf32>
      %198 = arith.addf %193, %197 : vector<2x256xf32>
      %199 = vector.extract_strided_slice %125 {offsets = [1, 0], sizes = [1, 256], strides = [1, 1]} : vector<7x256xf32> to vector<1x256xf32>
      %200 = vector.broadcast %199 : vector<1x256xf32> to vector<2x256xf32>
      %201 = arith.mulf %198, %200 : vector<2x256xf32>
      %202 = arith.addf %164, %201 : vector<2x256xf32>
      %c0_64 = arith.constant 0 : index
      %c0_65 = arith.constant 0 : index
      %c79_66 = arith.constant 79 : index
      %203 = vector.load %arg8[%c0_64, %c0_65, %c79_66] : memref<2x2x435xf32, #tpu.memory_space<vmem>>, vector<1x2x256xf32>
      %204 = vector.shape_cast %203 : vector<1x2x256xf32> to vector<2x256xf32>
      %205 = vector.broadcast %29 : f32 to vector<2x256xf32>
      %206 = arith.mulf %205, %204 : vector<2x256xf32>
      %c0_67 = arith.constant 0 : index
      %c0_68 = arith.constant 0 : index
      %c95_69 = arith.constant 95 : index
      %207 = vector.load %arg8[%c0_67, %c0_68, %c95_69] : memref<2x2x435xf32, #tpu.memory_space<vmem>>, vector<1x2x256xf32>
      %208 = vector.shape_cast %207 : vector<1x2x256xf32> to vector<2x256xf32>
      %209 = vector.broadcast %36 : f32 to vector<2x256xf32>
      %210 = arith.mulf %209, %208 : vector<2x256xf32>
      %211 = arith.addf %206, %210 : vector<2x256xf32>
      %c0_70 = arith.constant 0 : index
      %c0_71 = arith.constant 0 : index
      %c111 = arith.constant 111 : index
      %212 = vector.load %arg8[%c0_70, %c0_71, %c111] : memref<2x2x435xf32, #tpu.memory_space<vmem>>, vector<1x2x256xf32>
      %213 = vector.shape_cast %212 : vector<1x2x256xf32> to vector<2x256xf32>
      %214 = vector.broadcast %43 : f32 to vector<2x256xf32>
      %215 = arith.mulf %214, %213 : vector<2x256xf32>
      %216 = arith.addf %211, %215 : vector<2x256xf32>
      %c0_72 = arith.constant 0 : index
      %c0_73 = arith.constant 0 : index
      %c127 = arith.constant 127 : index
      %217 = vector.load %arg8[%c0_72, %c0_73, %c127] : memref<2x2x435xf32, #tpu.memory_space<vmem>>, vector<1x2x256xf32>
      %218 = vector.shape_cast %217 : vector<1x2x256xf32> to vector<2x256xf32>
      %219 = vector.broadcast %50 : f32 to vector<2x256xf32>
      %220 = arith.mulf %219, %218 : vector<2x256xf32>
      %221 = arith.addf %216, %220 : vector<2x256xf32>
      %c0_74 = arith.constant 0 : index
      %c0_75 = arith.constant 0 : index
      %c143 = arith.constant 143 : index
      %222 = vector.load %arg8[%c0_74, %c0_75, %c143] : memref<2x2x435xf32, #tpu.memory_space<vmem>>, vector<1x2x256xf32>
      %223 = vector.shape_cast %222 : vector<1x2x256xf32> to vector<2x256xf32>
      %224 = vector.broadcast %57 : f32 to vector<2x256xf32>
      %225 = arith.mulf %224, %223 : vector<2x256xf32>
      %226 = arith.addf %221, %225 : vector<2x256xf32>
      %c0_76 = arith.constant 0 : index
      %c0_77 = arith.constant 0 : index
      %c159 = arith.constant 159 : index
      %227 = vector.load %arg8[%c0_76, %c0_77, %c159] : memref<2x2x435xf32, #tpu.memory_space<vmem>>, vector<1x2x256xf32>
      %228 = vector.shape_cast %227 : vector<1x2x256xf32> to vector<2x256xf32>
      %229 = vector.broadcast %64 : f32 to vector<2x256xf32>
      %230 = arith.mulf %229, %228 : vector<2x256xf32>
      %231 = arith.addf %226, %230 : vector<2x256xf32>
      %c0_78 = arith.constant 0 : index
      %c0_79 = arith.constant 0 : index
      %c175 = arith.constant 175 : index
      %232 = vector.load %arg8[%c0_78, %c0_79, %c175] : memref<2x2x435xf32, #tpu.memory_space<vmem>>, vector<1x2x256xf32>
      %233 = vector.shape_cast %232 : vector<1x2x256xf32> to vector<2x256xf32>
      %234 = vector.broadcast %71 : f32 to vector<2x256xf32>
      %235 = arith.mulf %234, %233 : vector<2x256xf32>
      %236 = arith.addf %231, %235 : vector<2x256xf32>
      %237 = vector.extract_strided_slice %125 {offsets = [2, 0], sizes = [1, 256], strides = [1, 1]} : vector<7x256xf32> to vector<1x256xf32>
      %238 = vector.broadcast %237 : vector<1x256xf32> to vector<2x256xf32>
      %239 = arith.mulf %236, %238 : vector<2x256xf32>
      %240 = arith.addf %202, %239 : vector<2x256xf32>
      %c0_80 = arith.constant 0 : index
      %c0_81 = arith.constant 0 : index
      %c80_82 = arith.constant 80 : index
      %241 = vector.load %arg8[%c0_80, %c0_81, %c80_82] : memref<2x2x435xf32, #tpu.memory_space<vmem>>, vector<1x2x256xf32>
      %242 = vector.shape_cast %241 : vector<1x2x256xf32> to vector<2x256xf32>
      %243 = vector.broadcast %30 : f32 to vector<2x256xf32>
      %244 = arith.mulf %243, %242 : vector<2x256xf32>
      %c0_83 = arith.constant 0 : index
      %c0_84 = arith.constant 0 : index
      %c96_85 = arith.constant 96 : index
      %245 = vector.load %arg8[%c0_83, %c0_84, %c96_85] : memref<2x2x435xf32, #tpu.memory_space<vmem>>, vector<1x2x256xf32>
      %246 = vector.shape_cast %245 : vector<1x2x256xf32> to vector<2x256xf32>
      %247 = vector.broadcast %37 : f32 to vector<2x256xf32>
      %248 = arith.mulf %247, %246 : vector<2x256xf32>
      %249 = arith.addf %244, %248 : vector<2x256xf32>
      %c0_86 = arith.constant 0 : index
      %c0_87 = arith.constant 0 : index
      %c112 = arith.constant 112 : index
      %250 = vector.load %arg8[%c0_86, %c0_87, %c112] : memref<2x2x435xf32, #tpu.memory_space<vmem>>, vector<1x2x256xf32>
      %251 = vector.shape_cast %250 : vector<1x2x256xf32> to vector<2x256xf32>
      %252 = vector.broadcast %44 : f32 to vector<2x256xf32>
      %253 = arith.mulf %252, %251 : vector<2x256xf32>
      %254 = arith.addf %249, %253 : vector<2x256xf32>
      %c0_88 = arith.constant 0 : index
      %c0_89 = arith.constant 0 : index
      %c128_90 = arith.constant 128 : index
      %255 = vector.load %arg8[%c0_88, %c0_89, %c128_90] : memref<2x2x435xf32, #tpu.memory_space<vmem>>, vector<1x2x256xf32>
      %256 = vector.shape_cast %255 : vector<1x2x256xf32> to vector<2x256xf32>
      %257 = vector.broadcast %51 : f32 to vector<2x256xf32>
      %258 = arith.mulf %257, %256 : vector<2x256xf32>
      %259 = arith.addf %254, %258 : vector<2x256xf32>
      %c0_91 = arith.constant 0 : index
      %c0_92 = arith.constant 0 : index
      %c144 = arith.constant 144 : index
      %260 = vector.load %arg8[%c0_91, %c0_92, %c144] : memref<2x2x435xf32, #tpu.memory_space<vmem>>, vector<1x2x256xf32>
      %261 = vector.shape_cast %260 : vector<1x2x256xf32> to vector<2x256xf32>
      %262 = vector.broadcast %58 : f32 to vector<2x256xf32>
      %263 = arith.mulf %262, %261 : vector<2x256xf32>
      %264 = arith.addf %259, %263 : vector<2x256xf32>
      %c0_93 = arith.constant 0 : index
      %c0_94 = arith.constant 0 : index
      %c160 = arith.constant 160 : index
      %265 = vector.load %arg8[%c0_93, %c0_94, %c160] : memref<2x2x435xf32, #tpu.memory_space<vmem>>, vector<1x2x256xf32>
      %266 = vector.shape_cast %265 : vector<1x2x256xf32> to vector<2x256xf32>
      %267 = vector.broadcast %65 : f32 to vector<2x256xf32>
      %268 = arith.mulf %267, %266 : vector<2x256xf32>
      %269 = arith.addf %264, %268 : vector<2x256xf32>
      %c0_95 = arith.constant 0 : index
      %c0_96 = arith.constant 0 : index
      %c176 = arith.constant 176 : index
      %270 = vector.load %arg8[%c0_95, %c0_96, %c176] : memref<2x2x435xf32, #tpu.memory_space<vmem>>, vector<1x2x256xf32>
      %271 = vector.shape_cast %270 : vector<1x2x256xf32> to vector<2x256xf32>
      %272 = vector.broadcast %72 : f32 to vector<2x256xf32>
      %273 = arith.mulf %272, %271 : vector<2x256xf32>
      %274 = arith.addf %269, %273 : vector<2x256xf32>
      %275 = arith.addf %240, %274 : vector<2x256xf32>
      %c0_97 = arith.constant 0 : index
      %c0_98 = arith.constant 0 : index
      %c81_99 = arith.constant 81 : index
      %276 = vector.load %arg8[%c0_97, %c0_98, %c81_99] : memref<2x2x435xf32, #tpu.memory_space<vmem>>, vector<1x2x256xf32>
      %277 = vector.shape_cast %276 : vector<1x2x256xf32> to vector<2x256xf32>
      %278 = vector.broadcast %31 : f32 to vector<2x256xf32>
      %279 = arith.mulf %278, %277 : vector<2x256xf32>
      %c0_100 = arith.constant 0 : index
      %c0_101 = arith.constant 0 : index
      %c97_102 = arith.constant 97 : index
      %280 = vector.load %arg8[%c0_100, %c0_101, %c97_102] : memref<2x2x435xf32, #tpu.memory_space<vmem>>, vector<1x2x256xf32>
      %281 = vector.shape_cast %280 : vector<1x2x256xf32> to vector<2x256xf32>
      %282 = vector.broadcast %38 : f32 to vector<2x256xf32>
      %283 = arith.mulf %282, %281 : vector<2x256xf32>
      %284 = arith.addf %279, %283 : vector<2x256xf32>
      %c0_103 = arith.constant 0 : index
      %c0_104 = arith.constant 0 : index
      %c113 = arith.constant 113 : index
      %285 = vector.load %arg8[%c0_103, %c0_104, %c113] : memref<2x2x435xf32, #tpu.memory_space<vmem>>, vector<1x2x256xf32>
      %286 = vector.shape_cast %285 : vector<1x2x256xf32> to vector<2x256xf32>
      %287 = vector.broadcast %45 : f32 to vector<2x256xf32>
      %288 = arith.mulf %287, %286 : vector<2x256xf32>
      %289 = arith.addf %284, %288 : vector<2x256xf32>
      %c0_105 = arith.constant 0 : index
      %c0_106 = arith.constant 0 : index
      %c129 = arith.constant 129 : index
      %290 = vector.load %arg8[%c0_105, %c0_106, %c129] : memref<2x2x435xf32, #tpu.memory_space<vmem>>, vector<1x2x256xf32>
      %291 = vector.shape_cast %290 : vector<1x2x256xf32> to vector<2x256xf32>
      %292 = vector.broadcast %52 : f32 to vector<2x256xf32>
      %293 = arith.mulf %292, %291 : vector<2x256xf32>
      %294 = arith.addf %289, %293 : vector<2x256xf32>
      %c0_107 = arith.constant 0 : index
      %c0_108 = arith.constant 0 : index
      %c145 = arith.constant 145 : index
      %295 = vector.load %arg8[%c0_107, %c0_108, %c145] : memref<2x2x435xf32, #tpu.memory_space<vmem>>, vector<1x2x256xf32>
      %296 = vector.shape_cast %295 : vector<1x2x256xf32> to vector<2x256xf32>
      %297 = vector.broadcast %59 : f32 to vector<2x256xf32>
      %298 = arith.mulf %297, %296 : vector<2x256xf32>
      %299 = arith.addf %294, %298 : vector<2x256xf32>
      %c0_109 = arith.constant 0 : index
      %c0_110 = arith.constant 0 : index
      %c161 = arith.constant 161 : index
      %300 = vector.load %arg8[%c0_109, %c0_110, %c161] : memref<2x2x435xf32, #tpu.memory_space<vmem>>, vector<1x2x256xf32>
      %301 = vector.shape_cast %300 : vector<1x2x256xf32> to vector<2x256xf32>
      %302 = vector.broadcast %66 : f32 to vector<2x256xf32>
      %303 = arith.mulf %302, %301 : vector<2x256xf32>
      %304 = arith.addf %299, %303 : vector<2x256xf32>
      %c0_111 = arith.constant 0 : index
      %c0_112 = arith.constant 0 : index
      %c177 = arith.constant 177 : index
      %305 = vector.load %arg8[%c0_111, %c0_112, %c177] : memref<2x2x435xf32, #tpu.memory_space<vmem>>, vector<1x2x256xf32>
      %306 = vector.shape_cast %305 : vector<1x2x256xf32> to vector<2x256xf32>
      %307 = vector.broadcast %73 : f32 to vector<2x256xf32>
      %308 = arith.mulf %307, %306 : vector<2x256xf32>
      %309 = arith.addf %304, %308 : vector<2x256xf32>
      %310 = vector.extract_strided_slice %125 {offsets = [4, 0], sizes = [1, 256], strides = [1, 1]} : vector<7x256xf32> to vector<1x256xf32>
      %311 = vector.broadcast %310 : vector<1x256xf32> to vector<2x256xf32>
      %312 = arith.mulf %309, %311 : vector<2x256xf32>
      %313 = arith.addf %275, %312 : vector<2x256xf32>
      %c0_113 = arith.constant 0 : index
      %c0_114 = arith.constant 0 : index
      %c82_115 = arith.constant 82 : index
      %314 = vector.load %arg8[%c0_113, %c0_114, %c82_115] : memref<2x2x435xf32, #tpu.memory_space<vmem>>, vector<1x2x256xf32>
      %315 = vector.shape_cast %314 : vector<1x2x256xf32> to vector<2x256xf32>
      %316 = vector.broadcast %32 : f32 to vector<2x256xf32>
      %317 = arith.mulf %316, %315 : vector<2x256xf32>
      %c0_116 = arith.constant 0 : index
      %c0_117 = arith.constant 0 : index
      %c98 = arith.constant 98 : index
      %318 = vector.load %arg8[%c0_116, %c0_117, %c98] : memref<2x2x435xf32, #tpu.memory_space<vmem>>, vector<1x2x256xf32>
      %319 = vector.shape_cast %318 : vector<1x2x256xf32> to vector<2x256xf32>
      %320 = vector.broadcast %39 : f32 to vector<2x256xf32>
      %321 = arith.mulf %320, %319 : vector<2x256xf32>
      %322 = arith.addf %317, %321 : vector<2x256xf32>
      %c0_118 = arith.constant 0 : index
      %c0_119 = arith.constant 0 : index
      %c114 = arith.constant 114 : index
      %323 = vector.load %arg8[%c0_118, %c0_119, %c114] : memref<2x2x435xf32, #tpu.memory_space<vmem>>, vector<1x2x256xf32>
      %324 = vector.shape_cast %323 : vector<1x2x256xf32> to vector<2x256xf32>
      %325 = vector.broadcast %46 : f32 to vector<2x256xf32>
      %326 = arith.mulf %325, %324 : vector<2x256xf32>
      %327 = arith.addf %322, %326 : vector<2x256xf32>
      %c0_120 = arith.constant 0 : index
      %c0_121 = arith.constant 0 : index
      %c130 = arith.constant 130 : index
      %328 = vector.load %arg8[%c0_120, %c0_121, %c130] : memref<2x2x435xf32, #tpu.memory_space<vmem>>, vector<1x2x256xf32>
      %329 = vector.shape_cast %328 : vector<1x2x256xf32> to vector<2x256xf32>
      %330 = vector.broadcast %53 : f32 to vector<2x256xf32>
      %331 = arith.mulf %330, %329 : vector<2x256xf32>
      %332 = arith.addf %327, %331 : vector<2x256xf32>
      %c0_122 = arith.constant 0 : index
      %c0_123 = arith.constant 0 : index
      %c146 = arith.constant 146 : index
      %333 = vector.load %arg8[%c0_122, %c0_123, %c146] : memref<2x2x435xf32, #tpu.memory_space<vmem>>, vector<1x2x256xf32>
      %334 = vector.shape_cast %333 : vector<1x2x256xf32> to vector<2x256xf32>
      %335 = vector.broadcast %60 : f32 to vector<2x256xf32>
      %336 = arith.mulf %335, %334 : vector<2x256xf32>
      %337 = arith.addf %332, %336 : vector<2x256xf32>
      %c0_124 = arith.constant 0 : index
      %c0_125 = arith.constant 0 : index
      %c162 = arith.constant 162 : index
      %338 = vector.load %arg8[%c0_124, %c0_125, %c162] : memref<2x2x435xf32, #tpu.memory_space<vmem>>, vector<1x2x256xf32>
      %339 = vector.shape_cast %338 : vector<1x2x256xf32> to vector<2x256xf32>
      %340 = vector.broadcast %67 : f32 to vector<2x256xf32>
      %341 = arith.mulf %340, %339 : vector<2x256xf32>
      %342 = arith.addf %337, %341 : vector<2x256xf32>
      %c0_126 = arith.constant 0 : index
      %c0_127 = arith.constant 0 : index
      %c178 = arith.constant 178 : index
      %343 = vector.load %arg8[%c0_126, %c0_127, %c178] : memref<2x2x435xf32, #tpu.memory_space<vmem>>, vector<1x2x256xf32>
      %344 = vector.shape_cast %343 : vector<1x2x256xf32> to vector<2x256xf32>
      %345 = vector.broadcast %74 : f32 to vector<2x256xf32>
      %346 = arith.mulf %345, %344 : vector<2x256xf32>
      %347 = arith.addf %342, %346 : vector<2x256xf32>
      %348 = vector.extract_strided_slice %125 {offsets = [5, 0], sizes = [1, 256], strides = [1, 1]} : vector<7x256xf32> to vector<1x256xf32>
      %349 = vector.broadcast %348 : vector<1x256xf32> to vector<2x256xf32>
      %350 = arith.mulf %347, %349 : vector<2x256xf32>
      %351 = arith.addf %313, %350 : vector<2x256xf32>
      %c0_128 = arith.constant 0 : index
      %c0_129 = arith.constant 0 : index
      %c83_130 = arith.constant 83 : index
      %352 = vector.load %arg8[%c0_128, %c0_129, %c83_130] : memref<2x2x435xf32, #tpu.memory_space<vmem>>, vector<1x2x256xf32>
      %353 = vector.shape_cast %352 : vector<1x2x256xf32> to vector<2x256xf32>
      %354 = vector.broadcast %33 : f32 to vector<2x256xf32>
      %355 = arith.mulf %354, %353 : vector<2x256xf32>
      %c0_131 = arith.constant 0 : index
      %c0_132 = arith.constant 0 : index
      %c99 = arith.constant 99 : index
      %356 = vector.load %arg8[%c0_131, %c0_132, %c99] : memref<2x2x435xf32, #tpu.memory_space<vmem>>, vector<1x2x256xf32>
      %357 = vector.shape_cast %356 : vector<1x2x256xf32> to vector<2x256xf32>
      %358 = vector.broadcast %40 : f32 to vector<2x256xf32>
      %359 = arith.mulf %358, %357 : vector<2x256xf32>
      %360 = arith.addf %355, %359 : vector<2x256xf32>
      %c0_133 = arith.constant 0 : index
      %c0_134 = arith.constant 0 : index
      %c115 = arith.constant 115 : index
      %361 = vector.load %arg8[%c0_133, %c0_134, %c115] : memref<2x2x435xf32, #tpu.memory_space<vmem>>, vector<1x2x256xf32>
      %362 = vector.shape_cast %361 : vector<1x2x256xf32> to vector<2x256xf32>
      %363 = vector.broadcast %47 : f32 to vector<2x256xf32>
      %364 = arith.mulf %363, %362 : vector<2x256xf32>
      %365 = arith.addf %360, %364 : vector<2x256xf32>
      %c0_135 = arith.constant 0 : index
      %c0_136 = arith.constant 0 : index
      %c131 = arith.constant 131 : index
      %366 = vector.load %arg8[%c0_135, %c0_136, %c131] : memref<2x2x435xf32, #tpu.memory_space<vmem>>, vector<1x2x256xf32>
      %367 = vector.shape_cast %366 : vector<1x2x256xf32> to vector<2x256xf32>
      %368 = vector.broadcast %54 : f32 to vector<2x256xf32>
      %369 = arith.mulf %368, %367 : vector<2x256xf32>
      %370 = arith.addf %365, %369 : vector<2x256xf32>
      %c0_137 = arith.constant 0 : index
      %c0_138 = arith.constant 0 : index
      %c147 = arith.constant 147 : index
      %371 = vector.load %arg8[%c0_137, %c0_138, %c147] : memref<2x2x435xf32, #tpu.memory_space<vmem>>, vector<1x2x256xf32>
      %372 = vector.shape_cast %371 : vector<1x2x256xf32> to vector<2x256xf32>
      %373 = vector.broadcast %61 : f32 to vector<2x256xf32>
      %374 = arith.mulf %373, %372 : vector<2x256xf32>
      %375 = arith.addf %370, %374 : vector<2x256xf32>
      %c0_139 = arith.constant 0 : index
      %c0_140 = arith.constant 0 : index
      %c163 = arith.constant 163 : index
      %376 = vector.load %arg8[%c0_139, %c0_140, %c163] : memref<2x2x435xf32, #tpu.memory_space<vmem>>, vector<1x2x256xf32>
      %377 = vector.shape_cast %376 : vector<1x2x256xf32> to vector<2x256xf32>
      %378 = vector.broadcast %68 : f32 to vector<2x256xf32>
      %379 = arith.mulf %378, %377 : vector<2x256xf32>
      %380 = arith.addf %375, %379 : vector<2x256xf32>
      %c0_141 = arith.constant 0 : index
      %c0_142 = arith.constant 0 : index
      %c179 = arith.constant 179 : index
      %381 = vector.load %arg8[%c0_141, %c0_142, %c179] : memref<2x2x435xf32, #tpu.memory_space<vmem>>, vector<1x2x256xf32>
      %382 = vector.shape_cast %381 : vector<1x2x256xf32> to vector<2x256xf32>
      %383 = vector.broadcast %75 : f32 to vector<2x256xf32>
      %384 = arith.mulf %383, %382 : vector<2x256xf32>
      %385 = arith.addf %380, %384 : vector<2x256xf32>
      %386 = vector.extract_strided_slice %125 {offsets = [6, 0], sizes = [1, 256], strides = [1, 1]} : vector<7x256xf32> to vector<1x256xf32>
      %387 = vector.broadcast %386 : vector<1x256xf32> to vector<2x256xf32>
      %388 = arith.mulf %385, %387 : vector<2x256xf32>
      %389 = arith.addf %351, %388 : vector<2x256xf32>
      %c1_143 = arith.constant 1 : index
      %c0_144 = arith.constant 0 : index
      %c77_145 = arith.constant 77 : index
      %390 = vector.load %arg8[%c1_143, %c0_144, %c77_145] : memref<2x2x435xf32, #tpu.memory_space<vmem>>, vector<1x2x256xf32>
      %391 = vector.shape_cast %390 : vector<1x2x256xf32> to vector<2x256xf32>
      %392 = vector.broadcast %76 : f32 to vector<2x256xf32>
      %393 = arith.mulf %392, %391 : vector<2x256xf32>
      %c1_146 = arith.constant 1 : index
      %c0_147 = arith.constant 0 : index
      %c93_148 = arith.constant 93 : index
      %394 = vector.load %arg8[%c1_146, %c0_147, %c93_148] : memref<2x2x435xf32, #tpu.memory_space<vmem>>, vector<1x2x256xf32>
      %395 = vector.shape_cast %394 : vector<1x2x256xf32> to vector<2x256xf32>
      %396 = vector.broadcast %83 : f32 to vector<2x256xf32>
      %397 = arith.mulf %396, %395 : vector<2x256xf32>
      %398 = arith.addf %393, %397 : vector<2x256xf32>
      %c1_149 = arith.constant 1 : index
      %c0_150 = arith.constant 0 : index
      %c109_151 = arith.constant 109 : index
      %399 = vector.load %arg8[%c1_149, %c0_150, %c109_151] : memref<2x2x435xf32, #tpu.memory_space<vmem>>, vector<1x2x256xf32>
      %400 = vector.shape_cast %399 : vector<1x2x256xf32> to vector<2x256xf32>
      %401 = vector.broadcast %90 : f32 to vector<2x256xf32>
      %402 = arith.mulf %401, %400 : vector<2x256xf32>
      %403 = arith.addf %398, %402 : vector<2x256xf32>
      %c1_152 = arith.constant 1 : index
      %c0_153 = arith.constant 0 : index
      %c125_154 = arith.constant 125 : index
      %404 = vector.load %arg8[%c1_152, %c0_153, %c125_154] : memref<2x2x435xf32, #tpu.memory_space<vmem>>, vector<1x2x256xf32>
      %405 = vector.shape_cast %404 : vector<1x2x256xf32> to vector<2x256xf32>
      %406 = vector.broadcast %97 : f32 to vector<2x256xf32>
      %407 = arith.mulf %406, %405 : vector<2x256xf32>
      %408 = arith.addf %403, %407 : vector<2x256xf32>
      %c1_155 = arith.constant 1 : index
      %c0_156 = arith.constant 0 : index
      %c141_157 = arith.constant 141 : index
      %409 = vector.load %arg8[%c1_155, %c0_156, %c141_157] : memref<2x2x435xf32, #tpu.memory_space<vmem>>, vector<1x2x256xf32>
      %410 = vector.shape_cast %409 : vector<1x2x256xf32> to vector<2x256xf32>
      %411 = vector.broadcast %104 : f32 to vector<2x256xf32>
      %412 = arith.mulf %411, %410 : vector<2x256xf32>
      %413 = arith.addf %408, %412 : vector<2x256xf32>
      %c1_158 = arith.constant 1 : index
      %c0_159 = arith.constant 0 : index
      %c157_160 = arith.constant 157 : index
      %414 = vector.load %arg8[%c1_158, %c0_159, %c157_160] : memref<2x2x435xf32, #tpu.memory_space<vmem>>, vector<1x2x256xf32>
      %415 = vector.shape_cast %414 : vector<1x2x256xf32> to vector<2x256xf32>
      %416 = vector.broadcast %111 : f32 to vector<2x256xf32>
      %417 = arith.mulf %416, %415 : vector<2x256xf32>
      %418 = arith.addf %413, %417 : vector<2x256xf32>
      %c1_161 = arith.constant 1 : index
      %c0_162 = arith.constant 0 : index
      %c173_163 = arith.constant 173 : index
      %419 = vector.load %arg8[%c1_161, %c0_162, %c173_163] : memref<2x2x435xf32, #tpu.memory_space<vmem>>, vector<1x2x256xf32>
      %420 = vector.shape_cast %419 : vector<1x2x256xf32> to vector<2x256xf32>
      %421 = vector.broadcast %118 : f32 to vector<2x256xf32>
      %422 = arith.mulf %421, %420 : vector<2x256xf32>
      %423 = arith.addf %418, %422 : vector<2x256xf32>
      %424 = vector.extract_strided_slice %125 {offsets = [0, 0], sizes = [1, 256], strides = [1, 1]} : vector<7x256xf32> to vector<1x256xf32>
      %425 = vector.broadcast %424 : vector<1x256xf32> to vector<2x256xf32>
      %426 = arith.mulf %423, %425 : vector<2x256xf32>
      %427 = arith.addf %389, %426 : vector<2x256xf32>
      %c1_164 = arith.constant 1 : index
      %c0_165 = arith.constant 0 : index
      %c78_166 = arith.constant 78 : index
      %428 = vector.load %arg8[%c1_164, %c0_165, %c78_166] : memref<2x2x435xf32, #tpu.memory_space<vmem>>, vector<1x2x256xf32>
      %429 = vector.shape_cast %428 : vector<1x2x256xf32> to vector<2x256xf32>
      %430 = vector.broadcast %77 : f32 to vector<2x256xf32>
      %431 = arith.mulf %430, %429 : vector<2x256xf32>
      %c1_167 = arith.constant 1 : index
      %c0_168 = arith.constant 0 : index
      %c94_169 = arith.constant 94 : index
      %432 = vector.load %arg8[%c1_167, %c0_168, %c94_169] : memref<2x2x435xf32, #tpu.memory_space<vmem>>, vector<1x2x256xf32>
      %433 = vector.shape_cast %432 : vector<1x2x256xf32> to vector<2x256xf32>
      %434 = vector.broadcast %84 : f32 to vector<2x256xf32>
      %435 = arith.mulf %434, %433 : vector<2x256xf32>
      %436 = arith.addf %431, %435 : vector<2x256xf32>
      %c1_170 = arith.constant 1 : index
      %c0_171 = arith.constant 0 : index
      %c110_172 = arith.constant 110 : index
      %437 = vector.load %arg8[%c1_170, %c0_171, %c110_172] : memref<2x2x435xf32, #tpu.memory_space<vmem>>, vector<1x2x256xf32>
      %438 = vector.shape_cast %437 : vector<1x2x256xf32> to vector<2x256xf32>
      %439 = vector.broadcast %91 : f32 to vector<2x256xf32>
      %440 = arith.mulf %439, %438 : vector<2x256xf32>
      %441 = arith.addf %436, %440 : vector<2x256xf32>
      %c1_173 = arith.constant 1 : index
      %c0_174 = arith.constant 0 : index
      %c126_175 = arith.constant 126 : index
      %442 = vector.load %arg8[%c1_173, %c0_174, %c126_175] : memref<2x2x435xf32, #tpu.memory_space<vmem>>, vector<1x2x256xf32>
      %443 = vector.shape_cast %442 : vector<1x2x256xf32> to vector<2x256xf32>
      %444 = vector.broadcast %98 : f32 to vector<2x256xf32>
      %445 = arith.mulf %444, %443 : vector<2x256xf32>
      %446 = arith.addf %441, %445 : vector<2x256xf32>
      %c1_176 = arith.constant 1 : index
      %c0_177 = arith.constant 0 : index
      %c142_178 = arith.constant 142 : index
      %447 = vector.load %arg8[%c1_176, %c0_177, %c142_178] : memref<2x2x435xf32, #tpu.memory_space<vmem>>, vector<1x2x256xf32>
      %448 = vector.shape_cast %447 : vector<1x2x256xf32> to vector<2x256xf32>
      %449 = vector.broadcast %105 : f32 to vector<2x256xf32>
      %450 = arith.mulf %449, %448 : vector<2x256xf32>
      %451 = arith.addf %446, %450 : vector<2x256xf32>
      %c1_179 = arith.constant 1 : index
      %c0_180 = arith.constant 0 : index
      %c158_181 = arith.constant 158 : index
      %452 = vector.load %arg8[%c1_179, %c0_180, %c158_181] : memref<2x2x435xf32, #tpu.memory_space<vmem>>, vector<1x2x256xf32>
      %453 = vector.shape_cast %452 : vector<1x2x256xf32> to vector<2x256xf32>
      %454 = vector.broadcast %112 : f32 to vector<2x256xf32>
      %455 = arith.mulf %454, %453 : vector<2x256xf32>
      %456 = arith.addf %451, %455 : vector<2x256xf32>
      %c1_182 = arith.constant 1 : index
      %c0_183 = arith.constant 0 : index
      %c174_184 = arith.constant 174 : index
      %457 = vector.load %arg8[%c1_182, %c0_183, %c174_184] : memref<2x2x435xf32, #tpu.memory_space<vmem>>, vector<1x2x256xf32>
      %458 = vector.shape_cast %457 : vector<1x2x256xf32> to vector<2x256xf32>
      %459 = vector.broadcast %119 : f32 to vector<2x256xf32>
      %460 = arith.mulf %459, %458 : vector<2x256xf32>
      %461 = arith.addf %456, %460 : vector<2x256xf32>
      %462 = vector.extract_strided_slice %125 {offsets = [1, 0], sizes = [1, 256], strides = [1, 1]} : vector<7x256xf32> to vector<1x256xf32>
      %463 = vector.broadcast %462 : vector<1x256xf32> to vector<2x256xf32>
      %464 = arith.mulf %461, %463 : vector<2x256xf32>
      %465 = arith.addf %427, %464 : vector<2x256xf32>
      %c1_185 = arith.constant 1 : index
      %c0_186 = arith.constant 0 : index
      %c79_187 = arith.constant 79 : index
      %466 = vector.load %arg8[%c1_185, %c0_186, %c79_187] : memref<2x2x435xf32, #tpu.memory_space<vmem>>, vector<1x2x256xf32>
      %467 = vector.shape_cast %466 : vector<1x2x256xf32> to vector<2x256xf32>
      %468 = vector.broadcast %78 : f32 to vector<2x256xf32>
      %469 = arith.mulf %468, %467 : vector<2x256xf32>
      %c1_188 = arith.constant 1 : index
      %c0_189 = arith.constant 0 : index
      %c95_190 = arith.constant 95 : index
      %470 = vector.load %arg8[%c1_188, %c0_189, %c95_190] : memref<2x2x435xf32, #tpu.memory_space<vmem>>, vector<1x2x256xf32>
      %471 = vector.shape_cast %470 : vector<1x2x256xf32> to vector<2x256xf32>
      %472 = vector.broadcast %85 : f32 to vector<2x256xf32>
      %473 = arith.mulf %472, %471 : vector<2x256xf32>
      %474 = arith.addf %469, %473 : vector<2x256xf32>
      %c1_191 = arith.constant 1 : index
      %c0_192 = arith.constant 0 : index
      %c111_193 = arith.constant 111 : index
      %475 = vector.load %arg8[%c1_191, %c0_192, %c111_193] : memref<2x2x435xf32, #tpu.memory_space<vmem>>, vector<1x2x256xf32>
      %476 = vector.shape_cast %475 : vector<1x2x256xf32> to vector<2x256xf32>
      %477 = vector.broadcast %92 : f32 to vector<2x256xf32>
      %478 = arith.mulf %477, %476 : vector<2x256xf32>
      %479 = arith.addf %474, %478 : vector<2x256xf32>
      %c1_194 = arith.constant 1 : index
      %c0_195 = arith.constant 0 : index
      %c127_196 = arith.constant 127 : index
      %480 = vector.load %arg8[%c1_194, %c0_195, %c127_196] : memref<2x2x435xf32, #tpu.memory_space<vmem>>, vector<1x2x256xf32>
      %481 = vector.shape_cast %480 : vector<1x2x256xf32> to vector<2x256xf32>
      %482 = vector.broadcast %99 : f32 to vector<2x256xf32>
      %483 = arith.mulf %482, %481 : vector<2x256xf32>
      %484 = arith.addf %479, %483 : vector<2x256xf32>
      %c1_197 = arith.constant 1 : index
      %c0_198 = arith.constant 0 : index
      %c143_199 = arith.constant 143 : index
      %485 = vector.load %arg8[%c1_197, %c0_198, %c143_199] : memref<2x2x435xf32, #tpu.memory_space<vmem>>, vector<1x2x256xf32>
      %486 = vector.shape_cast %485 : vector<1x2x256xf32> to vector<2x256xf32>
      %487 = vector.broadcast %106 : f32 to vector<2x256xf32>
      %488 = arith.mulf %487, %486 : vector<2x256xf32>
      %489 = arith.addf %484, %488 : vector<2x256xf32>
      %c1_200 = arith.constant 1 : index
      %c0_201 = arith.constant 0 : index
      %c159_202 = arith.constant 159 : index
      %490 = vector.load %arg8[%c1_200, %c0_201, %c159_202] : memref<2x2x435xf32, #tpu.memory_space<vmem>>, vector<1x2x256xf32>
      %491 = vector.shape_cast %490 : vector<1x2x256xf32> to vector<2x256xf32>
      %492 = vector.broadcast %113 : f32 to vector<2x256xf32>
      %493 = arith.mulf %492, %491 : vector<2x256xf32>
      %494 = arith.addf %489, %493 : vector<2x256xf32>
      %c1_203 = arith.constant 1 : index
      %c0_204 = arith.constant 0 : index
      %c175_205 = arith.constant 175 : index
      %495 = vector.load %arg8[%c1_203, %c0_204, %c175_205] : memref<2x2x435xf32, #tpu.memory_space<vmem>>, vector<1x2x256xf32>
      %496 = vector.shape_cast %495 : vector<1x2x256xf32> to vector<2x256xf32>
      %497 = vector.broadcast %120 : f32 to vector<2x256xf32>
      %498 = arith.mulf %497, %496 : vector<2x256xf32>
      %499 = arith.addf %494, %498 : vector<2x256xf32>
      %500 = vector.extract_strided_slice %125 {offsets = [2, 0], sizes = [1, 256], strides = [1, 1]} : vector<7x256xf32> to vector<1x256xf32>
      %501 = vector.broadcast %500 : vector<1x256xf32> to vector<2x256xf32>
      %502 = arith.mulf %499, %501 : vector<2x256xf32>
      %503 = arith.addf %465, %502 : vector<2x256xf32>
      %c1_206 = arith.constant 1 : index
      %c0_207 = arith.constant 0 : index
      %c80_208 = arith.constant 80 : index
      %504 = vector.load %arg8[%c1_206, %c0_207, %c80_208] : memref<2x2x435xf32, #tpu.memory_space<vmem>>, vector<1x2x256xf32>
      %505 = vector.shape_cast %504 : vector<1x2x256xf32> to vector<2x256xf32>
      %506 = vector.broadcast %79 : f32 to vector<2x256xf32>
      %507 = arith.mulf %506, %505 : vector<2x256xf32>
      %c1_209 = arith.constant 1 : index
      %c0_210 = arith.constant 0 : index
      %c96_211 = arith.constant 96 : index
      %508 = vector.load %arg8[%c1_209, %c0_210, %c96_211] : memref<2x2x435xf32, #tpu.memory_space<vmem>>, vector<1x2x256xf32>
      %509 = vector.shape_cast %508 : vector<1x2x256xf32> to vector<2x256xf32>
      %510 = vector.broadcast %86 : f32 to vector<2x256xf32>
      %511 = arith.mulf %510, %509 : vector<2x256xf32>
      %512 = arith.addf %507, %511 : vector<2x256xf32>
      %c1_212 = arith.constant 1 : index
      %c0_213 = arith.constant 0 : index
      %c112_214 = arith.constant 112 : index
      %513 = vector.load %arg8[%c1_212, %c0_213, %c112_214] : memref<2x2x435xf32, #tpu.memory_space<vmem>>, vector<1x2x256xf32>
      %514 = vector.shape_cast %513 : vector<1x2x256xf32> to vector<2x256xf32>
      %515 = vector.broadcast %93 : f32 to vector<2x256xf32>
      %516 = arith.mulf %515, %514 : vector<2x256xf32>
      %517 = arith.addf %512, %516 : vector<2x256xf32>
      %c1_215 = arith.constant 1 : index
      %c0_216 = arith.constant 0 : index
      %c128_217 = arith.constant 128 : index
      %518 = vector.load %arg8[%c1_215, %c0_216, %c128_217] : memref<2x2x435xf32, #tpu.memory_space<vmem>>, vector<1x2x256xf32>
      %519 = vector.shape_cast %518 : vector<1x2x256xf32> to vector<2x256xf32>
      %520 = vector.broadcast %100 : f32 to vector<2x256xf32>
      %521 = arith.mulf %520, %519 : vector<2x256xf32>
      %522 = arith.addf %517, %521 : vector<2x256xf32>
      %c1_218 = arith.constant 1 : index
      %c0_219 = arith.constant 0 : index
      %c144_220 = arith.constant 144 : index
      %523 = vector.load %arg8[%c1_218, %c0_219, %c144_220] : memref<2x2x435xf32, #tpu.memory_space<vmem>>, vector<1x2x256xf32>
      %524 = vector.shape_cast %523 : vector<1x2x256xf32> to vector<2x256xf32>
      %525 = vector.broadcast %107 : f32 to vector<2x256xf32>
      %526 = arith.mulf %525, %524 : vector<2x256xf32>
      %527 = arith.addf %522, %526 : vector<2x256xf32>
      %c1_221 = arith.constant 1 : index
      %c0_222 = arith.constant 0 : index
      %c160_223 = arith.constant 160 : index
      %528 = vector.load %arg8[%c1_221, %c0_222, %c160_223] : memref<2x2x435xf32, #tpu.memory_space<vmem>>, vector<1x2x256xf32>
      %529 = vector.shape_cast %528 : vector<1x2x256xf32> to vector<2x256xf32>
      %530 = vector.broadcast %114 : f32 to vector<2x256xf32>
      %531 = arith.mulf %530, %529 : vector<2x256xf32>
      %532 = arith.addf %527, %531 : vector<2x256xf32>
      %c1_224 = arith.constant 1 : index
      %c0_225 = arith.constant 0 : index
      %c176_226 = arith.constant 176 : index
      %533 = vector.load %arg8[%c1_224, %c0_225, %c176_226] : memref<2x2x435xf32, #tpu.memory_space<vmem>>, vector<1x2x256xf32>
      %534 = vector.shape_cast %533 : vector<1x2x256xf32> to vector<2x256xf32>
      %535 = vector.broadcast %121 : f32 to vector<2x256xf32>
      %536 = arith.mulf %535, %534 : vector<2x256xf32>
      %537 = arith.addf %532, %536 : vector<2x256xf32>
      %538 = arith.addf %503, %537 : vector<2x256xf32>
      %c1_227 = arith.constant 1 : index
      %c0_228 = arith.constant 0 : index
      %c81_229 = arith.constant 81 : index
      %539 = vector.load %arg8[%c1_227, %c0_228, %c81_229] : memref<2x2x435xf32, #tpu.memory_space<vmem>>, vector<1x2x256xf32>
      %540 = vector.shape_cast %539 : vector<1x2x256xf32> to vector<2x256xf32>
      %541 = vector.broadcast %80 : f32 to vector<2x256xf32>
      %542 = arith.mulf %541, %540 : vector<2x256xf32>
      %c1_230 = arith.constant 1 : index
      %c0_231 = arith.constant 0 : index
      %c97_232 = arith.constant 97 : index
      %543 = vector.load %arg8[%c1_230, %c0_231, %c97_232] : memref<2x2x435xf32, #tpu.memory_space<vmem>>, vector<1x2x256xf32>
      %544 = vector.shape_cast %543 : vector<1x2x256xf32> to vector<2x256xf32>
      %545 = vector.broadcast %87 : f32 to vector<2x256xf32>
      %546 = arith.mulf %545, %544 : vector<2x256xf32>
      %547 = arith.addf %542, %546 : vector<2x256xf32>
      %c1_233 = arith.constant 1 : index
      %c0_234 = arith.constant 0 : index
      %c113_235 = arith.constant 113 : index
      %548 = vector.load %arg8[%c1_233, %c0_234, %c113_235] : memref<2x2x435xf32, #tpu.memory_space<vmem>>, vector<1x2x256xf32>
      %549 = vector.shape_cast %548 : vector<1x2x256xf32> to vector<2x256xf32>
      %550 = vector.broadcast %94 : f32 to vector<2x256xf32>
      %551 = arith.mulf %550, %549 : vector<2x256xf32>
      %552 = arith.addf %547, %551 : vector<2x256xf32>
      %c1_236 = arith.constant 1 : index
      %c0_237 = arith.constant 0 : index
      %c129_238 = arith.constant 129 : index
      %553 = vector.load %arg8[%c1_236, %c0_237, %c129_238] : memref<2x2x435xf32, #tpu.memory_space<vmem>>, vector<1x2x256xf32>
      %554 = vector.shape_cast %553 : vector<1x2x256xf32> to vector<2x256xf32>
      %555 = vector.broadcast %101 : f32 to vector<2x256xf32>
      %556 = arith.mulf %555, %554 : vector<2x256xf32>
      %557 = arith.addf %552, %556 : vector<2x256xf32>
      %c1_239 = arith.constant 1 : index
      %c0_240 = arith.constant 0 : index
      %c145_241 = arith.constant 145 : index
      %558 = vector.load %arg8[%c1_239, %c0_240, %c145_241] : memref<2x2x435xf32, #tpu.memory_space<vmem>>, vector<1x2x256xf32>
      %559 = vector.shape_cast %558 : vector<1x2x256xf32> to vector<2x256xf32>
      %560 = vector.broadcast %108 : f32 to vector<2x256xf32>
      %561 = arith.mulf %560, %559 : vector<2x256xf32>
      %562 = arith.addf %557, %561 : vector<2x256xf32>
      %c1_242 = arith.constant 1 : index
      %c0_243 = arith.constant 0 : index
      %c161_244 = arith.constant 161 : index
      %563 = vector.load %arg8[%c1_242, %c0_243, %c161_244] : memref<2x2x435xf32, #tpu.memory_space<vmem>>, vector<1x2x256xf32>
      %564 = vector.shape_cast %563 : vector<1x2x256xf32> to vector<2x256xf32>
      %565 = vector.broadcast %115 : f32 to vector<2x256xf32>
      %566 = arith.mulf %565, %564 : vector<2x256xf32>
      %567 = arith.addf %562, %566 : vector<2x256xf32>
      %c1_245 = arith.constant 1 : index
      %c0_246 = arith.constant 0 : index
      %c177_247 = arith.constant 177 : index
      %568 = vector.load %arg8[%c1_245, %c0_246, %c177_247] : memref<2x2x435xf32, #tpu.memory_space<vmem>>, vector<1x2x256xf32>
      %569 = vector.shape_cast %568 : vector<1x2x256xf32> to vector<2x256xf32>
      %570 = vector.broadcast %122 : f32 to vector<2x256xf32>
      %571 = arith.mulf %570, %569 : vector<2x256xf32>
      %572 = arith.addf %567, %571 : vector<2x256xf32>
      %573 = vector.extract_strided_slice %125 {offsets = [4, 0], sizes = [1, 256], strides = [1, 1]} : vector<7x256xf32> to vector<1x256xf32>
      %574 = vector.broadcast %573 : vector<1x256xf32> to vector<2x256xf32>
      %575 = arith.mulf %572, %574 : vector<2x256xf32>
      %576 = arith.addf %538, %575 : vector<2x256xf32>
      %c1_248 = arith.constant 1 : index
      %c0_249 = arith.constant 0 : index
      %c82_250 = arith.constant 82 : index
      %577 = vector.load %arg8[%c1_248, %c0_249, %c82_250] : memref<2x2x435xf32, #tpu.memory_space<vmem>>, vector<1x2x256xf32>
      %578 = vector.shape_cast %577 : vector<1x2x256xf32> to vector<2x256xf32>
      %579 = vector.broadcast %81 : f32 to vector<2x256xf32>
      %580 = arith.mulf %579, %578 : vector<2x256xf32>
      %c1_251 = arith.constant 1 : index
      %c0_252 = arith.constant 0 : index
      %c98_253 = arith.constant 98 : index
      %581 = vector.load %arg8[%c1_251, %c0_252, %c98_253] : memref<2x2x435xf32, #tpu.memory_space<vmem>>, vector<1x2x256xf32>
      %582 = vector.shape_cast %581 : vector<1x2x256xf32> to vector<2x256xf32>
      %583 = vector.broadcast %88 : f32 to vector<2x256xf32>
      %584 = arith.mulf %583, %582 : vector<2x256xf32>
      %585 = arith.addf %580, %584 : vector<2x256xf32>
      %c1_254 = arith.constant 1 : index
      %c0_255 = arith.constant 0 : index
      %c114_256 = arith.constant 114 : index
      %586 = vector.load %arg8[%c1_254, %c0_255, %c114_256] : memref<2x2x435xf32, #tpu.memory_space<vmem>>, vector<1x2x256xf32>
      %587 = vector.shape_cast %586 : vector<1x2x256xf32> to vector<2x256xf32>
      %588 = vector.broadcast %95 : f32 to vector<2x256xf32>
      %589 = arith.mulf %588, %587 : vector<2x256xf32>
      %590 = arith.addf %585, %589 : vector<2x256xf32>
      %c1_257 = arith.constant 1 : index
      %c0_258 = arith.constant 0 : index
      %c130_259 = arith.constant 130 : index
      %591 = vector.load %arg8[%c1_257, %c0_258, %c130_259] : memref<2x2x435xf32, #tpu.memory_space<vmem>>, vector<1x2x256xf32>
      %592 = vector.shape_cast %591 : vector<1x2x256xf32> to vector<2x256xf32>
      %593 = vector.broadcast %102 : f32 to vector<2x256xf32>
      %594 = arith.mulf %593, %592 : vector<2x256xf32>
      %595 = arith.addf %590, %594 : vector<2x256xf32>
      %c1_260 = arith.constant 1 : index
      %c0_261 = arith.constant 0 : index
      %c146_262 = arith.constant 146 : index
      %596 = vector.load %arg8[%c1_260, %c0_261, %c146_262] : memref<2x2x435xf32, #tpu.memory_space<vmem>>, vector<1x2x256xf32>
      %597 = vector.shape_cast %596 : vector<1x2x256xf32> to vector<2x256xf32>
      %598 = vector.broadcast %109 : f32 to vector<2x256xf32>
      %599 = arith.mulf %598, %597 : vector<2x256xf32>
      %600 = arith.addf %595, %599 : vector<2x256xf32>
      %c1_263 = arith.constant 1 : index
      %c0_264 = arith.constant 0 : index
      %c162_265 = arith.constant 162 : index
      %601 = vector.load %arg8[%c1_263, %c0_264, %c162_265] : memref<2x2x435xf32, #tpu.memory_space<vmem>>, vector<1x2x256xf32>
      %602 = vector.shape_cast %601 : vector<1x2x256xf32> to vector<2x256xf32>
      %603 = vector.broadcast %116 : f32 to vector<2x256xf32>
      %604 = arith.mulf %603, %602 : vector<2x256xf32>
      %605 = arith.addf %600, %604 : vector<2x256xf32>
      %c1_266 = arith.constant 1 : index
      %c0_267 = arith.constant 0 : index
      %c178_268 = arith.constant 178 : index
      %606 = vector.load %arg8[%c1_266, %c0_267, %c178_268] : memref<2x2x435xf32, #tpu.memory_space<vmem>>, vector<1x2x256xf32>
      %607 = vector.shape_cast %606 : vector<1x2x256xf32> to vector<2x256xf32>
      %608 = vector.broadcast %123 : f32 to vector<2x256xf32>
      %609 = arith.mulf %608, %607 : vector<2x256xf32>
      %610 = arith.addf %605, %609 : vector<2x256xf32>
      %611 = vector.extract_strided_slice %125 {offsets = [5, 0], sizes = [1, 256], strides = [1, 1]} : vector<7x256xf32> to vector<1x256xf32>
      %612 = vector.broadcast %611 : vector<1x256xf32> to vector<2x256xf32>
      %613 = arith.mulf %610, %612 : vector<2x256xf32>
      %614 = arith.addf %576, %613 : vector<2x256xf32>
      %c1_269 = arith.constant 1 : index
      %c0_270 = arith.constant 0 : index
      %c83_271 = arith.constant 83 : index
      %615 = vector.load %arg8[%c1_269, %c0_270, %c83_271] : memref<2x2x435xf32, #tpu.memory_space<vmem>>, vector<1x2x256xf32>
      %616 = vector.shape_cast %615 : vector<1x2x256xf32> to vector<2x256xf32>
      %617 = vector.broadcast %82 : f32 to vector<2x256xf32>
      %618 = arith.mulf %617, %616 : vector<2x256xf32>
      %c1_272 = arith.constant 1 : index
      %c0_273 = arith.constant 0 : index
      %c99_274 = arith.constant 99 : index
      %619 = vector.load %arg8[%c1_272, %c0_273, %c99_274] : memref<2x2x435xf32, #tpu.memory_space<vmem>>, vector<1x2x256xf32>
      %620 = vector.shape_cast %619 : vector<1x2x256xf32> to vector<2x256xf32>
      %621 = vector.broadcast %89 : f32 to vector<2x256xf32>
      %622 = arith.mulf %621, %620 : vector<2x256xf32>
      %623 = arith.addf %618, %622 : vector<2x256xf32>
      %c1_275 = arith.constant 1 : index
      %c0_276 = arith.constant 0 : index
      %c115_277 = arith.constant 115 : index
      %624 = vector.load %arg8[%c1_275, %c0_276, %c115_277] : memref<2x2x435xf32, #tpu.memory_space<vmem>>, vector<1x2x256xf32>
      %625 = vector.shape_cast %624 : vector<1x2x256xf32> to vector<2x256xf32>
      %626 = vector.broadcast %96 : f32 to vector<2x256xf32>
      %627 = arith.mulf %626, %625 : vector<2x256xf32>
      %628 = arith.addf %623, %627 : vector<2x256xf32>
      %c1_278 = arith.constant 1 : index
      %c0_279 = arith.constant 0 : index
      %c131_280 = arith.constant 131 : index
      %629 = vector.load %arg8[%c1_278, %c0_279, %c131_280] : memref<2x2x435xf32, #tpu.memory_space<vmem>>, vector<1x2x256xf32>
      %630 = vector.shape_cast %629 : vector<1x2x256xf32> to vector<2x256xf32>
      %631 = vector.broadcast %103 : f32 to vector<2x256xf32>
      %632 = arith.mulf %631, %630 : vector<2x256xf32>
      %633 = arith.addf %628, %632 : vector<2x256xf32>
      %c1_281 = arith.constant 1 : index
      %c0_282 = arith.constant 0 : index
      %c147_283 = arith.constant 147 : index
      %634 = vector.load %arg8[%c1_281, %c0_282, %c147_283] : memref<2x2x435xf32, #tpu.memory_space<vmem>>, vector<1x2x256xf32>
      %635 = vector.shape_cast %634 : vector<1x2x256xf32> to vector<2x256xf32>
      %636 = vector.broadcast %110 : f32 to vector<2x256xf32>
      %637 = arith.mulf %636, %635 : vector<2x256xf32>
      %638 = arith.addf %633, %637 : vector<2x256xf32>
      %c1_284 = arith.constant 1 : index
      %c0_285 = arith.constant 0 : index
      %c163_286 = arith.constant 163 : index
      %639 = vector.load %arg8[%c1_284, %c0_285, %c163_286] : memref<2x2x435xf32, #tpu.memory_space<vmem>>, vector<1x2x256xf32>
      %640 = vector.shape_cast %639 : vector<1x2x256xf32> to vector<2x256xf32>
      %641 = vector.broadcast %117 : f32 to vector<2x256xf32>
      %642 = arith.mulf %641, %640 : vector<2x256xf32>
      %643 = arith.addf %638, %642 : vector<2x256xf32>
      %c1_287 = arith.constant 1 : index
      %c0_288 = arith.constant 0 : index
      %c179_289 = arith.constant 179 : index
      %644 = vector.load %arg8[%c1_287, %c0_288, %c179_289] : memref<2x2x435xf32, #tpu.memory_space<vmem>>, vector<1x2x256xf32>
      %645 = vector.shape_cast %644 : vector<1x2x256xf32> to vector<2x256xf32>
      %646 = vector.broadcast %124 : f32 to vector<2x256xf32>
      %647 = arith.mulf %646, %645 : vector<2x256xf32>
      %648 = arith.addf %643, %647 : vector<2x256xf32>
      %649 = vector.extract_strided_slice %125 {offsets = [6, 0], sizes = [1, 256], strides = [1, 1]} : vector<7x256xf32> to vector<1x256xf32>
      %650 = vector.broadcast %649 : vector<1x256xf32> to vector<2x256xf32>
      %651 = arith.mulf %648, %650 : vector<2x256xf32>
      %652 = arith.addf %614, %651 : vector<2x256xf32>
      %653 = arith.negf %652 : vector<2x256xf32>
      %654 = math.exp %653 : vector<2x256xf32>
      %cst_290 = arith.constant 1.000000e+00 : f32
      %655 = vector.broadcast %cst_290 : f32 to vector<2x256xf32>
      %656 = arith.addf %655, %654 : vector<2x256xf32>
      %657 = arith.divf %655, %656 : vector<2x256xf32>
      %c0_291 = arith.constant 0 : index
      %c0_292 = arith.constant 0 : index
      %c0_293 = arith.constant 0 : index
      %658 = vector.load %arg5[%c0_291, %c0_292, %c0_293] : memref<1x2x256xf32, #tpu.memory_space<vmem>>, vector<1x2x256xf32>
      %659 = vector.shape_cast %658 : vector<1x2x256xf32> to vector<2x256xf32>
      %660 = vector.shape_cast %657 : vector<2x256xf32> to vector<1x2x256xf32>
      tpu.vector_store %arg5[%c0_291, %c0_292, %c0_293], %660 {strides = array<i32>} : memref<1x2x256xf32, #tpu.memory_space<vmem>>, vector<1x2x256xf32>,
    } else {
    }
    return
  }
  func.func @transform_0(%arg0: i32, %arg1: i32) -> i32 {
    %c0_i32 = arith.constant 0 : i32
    %c0_i32_0 = arith.constant 0 : i32
    return %c0_i32 : i32
  }
  func.func @transform_1(%arg0: i32, %arg1: i32) -> (i32, i32) {
    %c0_i32 = arith.constant 0 : i32
    %c0_i32_0 = arith.constant 0 : i32
    %c0_i32_1 = arith.constant 0 : i32
    return %c0_i32, %c0_i32_0 : i32, i32
  }
  func.func @transform_2(%arg0: i32, %arg1: i32) -> (i32, i32, i32) {
    %c0_i32 = arith.constant 0 : i32
    %c0_i32_0 = arith.constant 0 : i32
    return %arg0, %arg1, %c0_i32 : i32, i32, i32
  }
  func.func @transform_3(%arg0: i32, %arg1: i32) -> (i32, i32, i32) {
    %c0_i32 = arith.constant 0 : i32
    %c0_i32_0 = arith.constant 0 : i32
    %c0_i32_1 = arith.constant 0 : i32
    return %arg0, %c0_i32, %c0_i32_0 : i32, i32, i32
  }
}

</mosaic_0001>

<llo_original>
// kernel: tpu_custom_call.1
$region0: #{tpu_custom_call.1}
  #allocation0 [shape = 'u32[]', space=smem, size = 0x4, offset = 0x4, fixed_abs, tag = 'smem constant byte address 0x4 - core index']
  #allocation1 [shape = 'u32[144,128]{1,0:T(1,128)}', space=vmem, size = 0x12000, scoped, tag = 'internal scratch']
  #allocation2 [shape = 'f32[2,256]{1,0:T(2,128)}', space=vmem, size = 0x800, scoped, tag = 'scratch operand']
  #allocation3 [shape = 'f32[2,256]{1,0:T(2,128)}', space=vmem, size = 0x800, scoped, tag = 'scratch operand']
  #allocation4 [shape = 'f32[2,2,435]{2,1,0:T(2,128)}', space=vmem, size = 0x2000, scoped, tag = 'scratch operand']
  %s0 = inlined_call_operand.hbm [shape: f32[98], index: 0, kind: input, shape index: {}]
  %s1 = inlined_call_operand.hbm [shape: f32[7,256], index: 1, kind: input, shape index: {}]
  %s2 = inlined_call_operand.hbm [shape: f32[2,4,256], index: 2, kind: input, shape index: {}]
  %s3 = inlined_call_operand.hbm [shape: f32[1,2,256], index: 3, kind: output, shape index: {}]
  %s4 = sld [smem:[#allocation0]]
  $region42: #{tpu_custom_call.1} parent=0
    _
  %s6 = ssub.s32 1, %s4
  %s7 = scalar_select 0, %s6, %s4
  $region1: #{tpu_custom_call.1} parent=0
    #allocation5 [shape = 'u8[512]{0}', space=smem, size = 0x200, scoped, tag = 'input window, operand 0, single buffered']
    #allocation6 [shape = 's32[1]{0}', space=sflag, size = 0x4, scoped, tag = 'scoped memory for tpu_custom_call.1']
    #allocation7 [shape = 's32[1]{0}', space=sflag, size = 0x4, scoped, tag = 'scoped memory for tpu_custom_call.1']
    #allocation8 [shape = 's32[1]{0}', space=sflag, size = 0x4, scoped, tag = 'scoped memory for tpu_custom_call.1']
    #allocation9 [shape = 'u8[8192]{0}', space=vmem, size = 0x2000, scoped, tag = 'input window, operand 1, single buffered']
    #allocation10 [shape = 'u8[8192]{0}', space=vmem, size = 0x2000, scoped, tag = 'input window, operand 2, single buffered']
    #allocation11 [shape = 's32[1]{0}', space=sflag, size = 0x4, scoped, tag = 'scoped memory for tpu_custom_call.1']
    #allocation12 [shape = 'u8[2048]{0}', space=vmem, size = 0x800, scoped, tag = 'output window, operand 0, single buffered']
    %8 = vsyncpa [#allocation8], 0
    %9 = vsyncpa [#allocation6], 0
    %10 = vsyncpa [#allocation11], 0
    %11 = vsyncpa [#allocation7], 0
    // Predicated region
    $region2: #{tpu_custom_call.1} parent=1 // pred_check
      _
    $region3: #{tpu_custom_call.1} parent=1 // pred_check_branch
      %13 = sbr.rel (0) target = $region5
    $region4: #{tpu_custom_call.1} parent=1 // pred_region
      %s15 = ssub.s32 16, 16
      %16 = vsyncadd [#allocation8], %s15
      %19 = dma.hbm_to_smem %s0, 16, [#allocation5], [#allocation8]
    $region5: #{tpu_custom_call.1} parent=1 // pred_fallthru
      _
    // Predicated region
    $region6: #{tpu_custom_call.1} parent=1 // pred_check
      _
    $region7: #{tpu_custom_call.1} parent=1 // pred_check_branch
      %21 = sbr.rel (0) target = $region9
    $region8: #{tpu_custom_call.1} parent=1 // pred_region
      %s23 = ssub.s32 256, 256
      %24 = vsyncadd [#allocation6], %s23
      %s26 = sshll.u32 [#allocation9], 4
      %s27 = int_to_ptr.vmem [resolvable:$true] %s26
      %29 = dma.hbm_to_vmem [thread:$0]  %s1, 256, %s27, [#allocation6]
    $region9: #{tpu_custom_call.1} parent=1 // pred_fallthru
      _
    // Predicated region
    $region10: #{tpu_custom_call.1} parent=1 // pred_check
      _
    $region11: #{tpu_custom_call.1} parent=1 // pred_check_branch
      %31 = sbr.rel (0) target = $region13
    $region12: #{tpu_custom_call.1} parent=1 // pred_region
      %s33 = ssub.s32 256, 256
      %34 = vsyncadd [#allocation11], %s33
      %s35 = sshll.u32 [#allocation10], 4
      %s36 = int_to_ptr.vmem [resolvable:$true] %s35
      %41 = dma.hbm_to_vmem [thread:$0]  %s2, 256, %s36, [#allocation11], 128, 128, 8
    $region13: #{tpu_custom_call.1} parent=1 // pred_fallthru
      _
    // Predicated region
    $region14: #{tpu_custom_call.1} parent=1 // pred_check
      _
    $region15: #{tpu_custom_call.1} parent=1 // pred_check_branch
      %43 = sbr.rel (0) target = $region17
    $region16: #{tpu_custom_call.1} parent=1 // pred_region
      %44 = dma.done [#allocation8], 16
    $region17: #{tpu_custom_call.1} parent=1 // pred_fallthru
      _
    // Predicated region
    $region18: #{tpu_custom_call.1} parent=1 // pred_check
      _
    $region19: #{tpu_custom_call.1} parent=1 // pred_check_branch
      %46 = sbr.rel (0) target = $region21
    $region20: #{tpu_custom_call.1} parent=1 // pred_region
      %47 = dma.done [#allocation6], 256
    $region21: #{tpu_custom_call.1} parent=1 // pred_fallthru
      _
    // Predicated region
    $region22: #{tpu_custom_call.1} parent=1 // pred_check
      _
    $region23: #{tpu_custom_call.1} parent=1 // pred_check_branch
      %49 = sbr.rel (0) target = $region25
    $region24: #{tpu_custom_call.1} parent=1 // pred_region
      %50 = dma.done [#allocation11], 256
    $region25: #{tpu_custom_call.1} parent=1 // pred_fallthru
      _
    %51 = sfence
    %p52 = scmp.eq.s32.totalorder 0, 0
    // Predicated region
    $region26: #{tpu_custom_call.1} parent=1 // pred_check
      %p53 = pneg %p52
    $region27: #{tpu_custom_call.1} parent=1 // pred_check_branch
      %55 = sbr.rel (%p53) target = $region29
    $region28: #{tpu_custom_call.1} parent=1 // pred_region
      %56 = vst [vmem:[#allocation2] sm:$0xf] 0.0
      %57 = vst [vmem:[#allocation3] sm:$0xf] -inf
    $region29: #{tpu_custom_call.1} parent=1 // pred_fallthru
      _
    %v58 = vld [vmem:[#allocation10] sm:$0xff]
    %v59 = vld [vmem:[#allocation10 + $0x8] sm:$0xff]
    %v60 = vld [vmem:[#allocation2] sm:$0xf]
    %v63 = vcombine.high %v58, %v58
    %v64 = vcombine.high %v59, %v59
    %vm67 = vcmask 1043456
    %v68 = vsel %vm67, %v58, 0.0
    %v69 = vrot.slane %v68, 4
    %v70 = vadd.f32 %v68, %v69
    %v71 = vrot.slane %v70, 2
    %v72 = vadd.f32 %v70, %v71
    %v73 = vrot.slane %v72, 1
    %v74 = vadd.f32 %v72, %v73
    %v75 = vsel %vm67, %v63, 0.0
    %v76 = vrot.slane %v75, 4
    %v77 = vadd.f32 %v75, %v76
    %v78 = vrot.slane %v77, 2
    %v79 = vadd.f32 %v77, %v78
    %v80 = vrot.slane %v79, 1
    %v81 = vadd.f32 %v79, %v80
    %v82 = vsel %vm67, %v59, 0.0
    %v83 = vrot.slane %v82, 4
    %v84 = vadd.f32 %v82, %v83
    %v85 = vrot.slane %v84, 2
    %v86 = vadd.f32 %v84, %v85
    %v87 = vrot.slane %v86, 1
    %v88 = vadd.f32 %v86, %v87
    %v89 = vsel %vm67, %v64, 0.0
    %v90 = vrot.slane %v89, 4
    %v91 = vadd.f32 %v89, %v90
    %v92 = vrot.slane %v91, 2
    %v93 = vadd.f32 %v91, %v92
    %v94 = vrot.slane %v93, 1
    %v95 = vadd.f32 %v93, %v94
    %v100 = vcombine.low %v74, %v81
    %v102 = vunpack.c.l.s4 1983009808
    %v103 = vunpack.c.0.s8 %v102
    %v104 = vlaneseq
    %v105 = vshrl.u32 %v104, 7
    %v106 = vsub.s32 %v103, %v105
    %v107 = vrot.slane %v100, %v106
    %v108 = vcombine.low %v88, %v95
    %v110 = vunpack.c.l.s4 1983009808
    %v111 = vunpack.c.0.s8 %v110
    %v112 = vlaneseq
    %v113 = vshrl.u32 %v112, 7
    %v114 = vsub.s32 %v111, %v113
    %v115 = vrot.slane %v108, %v114
    %vm116 = vcmask 1044484
    %v117 = vsel %vm116, %v107, %v107
    %vm118 = vcmask 1046534
    %v119 = vsel %vm118, %v107, %v117
    %v120 = vrot.slane %v115, 7
    %vm121 = vcmask 1041409
    %v122 = vsel %vm121, %v120, %v119
    %vm123 = vcmask 1043459
    %v124 = vsel %vm123, %v120, %v122
    %vm125 = vcmask 1045509
    %v126 = vsel %vm125, %v120, %v124
    %vm127 = vcmask 1047559
    %v128 = vsel %vm127, %v120, %v126
    %v130 = vadd.f32 %v60, %v128
    %131 = vst [vmem:[#allocation2] sm:$0xf] %v130
    %v132 = vld [vmem:[#allocation3] sm:$0xf]
    %v133 = vsel %vm67, %v58, -inf
    %v134 = vrot.slane %v133, 4
    %v135 = vmax.f32 %v133, %v134
    %v136 = vrot.slane %v135, 2
    %v137 = vmax.f32 %v135, %v136
    %v138 = vrot.slane %v137, 1
    %v139 = vmax.f32 %v137, %v138
    %v140 = vsel %vm67, %v63, -inf
    %v141 = vrot.slane %v140, 4
    %v142 = vmax.f32 %v140, %v141
    %v143 = vrot.slane %v142, 2
    %v144 = vmax.f32 %v142, %v143
    %v145 = vrot.slane %v144, 1
    %v146 = vmax.f32 %v144, %v145
    %v147 = vsel %vm67, %v59, -inf
    %v148 = vrot.slane %v147, 4
    %v149 = vmax.f32 %v147, %v148
    %v150 = vrot.slane %v149, 2
    %v151 = vmax.f32 %v149, %v150
    %v152 = vrot.slane %v151, 1
    %v153 = vmax.f32 %v151, %v152
    %v154 = vsel %vm67, %v64, -inf
    %v155 = vrot.slane %v154, 4
    %v156 = vmax.f32 %v154, %v155
    %v157 = vrot.slane %v156, 2
    %v158 = vmax.f32 %v156, %v157
    %v159 = vrot.slane %v158, 1
    %v160 = vmax.f32 %v158, %v159
    %v165 = vcombine.low %v139, %v146
    %v167 = vunpack.c.l.s4 1983009808
    %v168 = vunpack.c.0.s8 %v167
    %v169 = vlaneseq
    %v170 = vshrl.u32 %v169, 7
    %v171 = vsub.s32 %v168, %v170
    %v172 = vrot.slane %v165, %v171
    %v173 = vcombine.low %v153, %v160
    %v175 = vunpack.c.l.s4 1983009808
    %v176 = vunpack.c.0.s8 %v175
    %v177 = vlaneseq
    %v178 = vshrl.u32 %v177, 7
    %v179 = vsub.s32 %v176, %v178
    %v180 = vrot.slane %v173, %v179
    %v181 = vsel %vm116, %v172, %v172
    %v182 = vsel %vm118, %v172, %v181
    %v183 = vrot.slane %v180, 7
    %v184 = vsel %vm121, %v183, %v182
    %v185 = vsel %vm123, %v183, %v184
    %v186 = vsel %vm125, %v183, %v185
    %v187 = vsel %vm127, %v183, %v186
    %v189 = vmax.f32 %v132, %v187
    %190 = vst [vmem:[#allocation3] sm:$0xf] %v189
    // Predicated region
    $region30: #{tpu_custom_call.1} parent=1 // pred_check
      %p191 = pneg %p52
    $region31: #{tpu_custom_call.1} parent=1 // pred_check_branch
      %193 = sbr.rel (%p191) target = $region33
    $region32: #{tpu_custom_call.1} parent=1 // pred_region
      %vm194 = vcmask 1041408
      %vm195 = vcmask 1043458
      %vm196 = vmor %vm195, %vm194
      %vm197 = vcmask 1045508
      %vm198 = vmor %vm197, %vm196
      %vm199 = vcmask 416774
      %vm200 = vmor %vm199, %vm198
      %201 = vst.msk [vmem:[#allocation4] sm:$0xff] %vm200, 0.0
      %202 = vst.msk [vmem:[#allocation4 + $0x8] sm:$0xff] %vm200, 0.0
      %v203 = vld [vmem:[#allocation2] sm:$0xf]
      %v204 = vmul.f32 %v203, 0.25
      %205 = vst [vmem:[#allocation4 + $0x2] sm:$0xf] %v204
      %v206 = vld [vmem:[#allocation3] sm:$0xf]
      %s207 = scalar_lea.vmem [#allocation4], 8
      %208 = vst [vmem:[%s207 + $0x2] sm:$0xf] %v206
      %s209 = sld [smem:[#allocation5]]
      %s210 = sld [smem:[#allocation5 + $0x1]]
      %s211 = sld [smem:[#allocation5 + $0x2]]
      %s212 = sld [smem:[#allocation5 + $0x3]]
      %s213 = sld [smem:[#allocation5 + $0x4]]
      %s214 = sld [smem:[#allocation5 + $0x5]]
      %s215 = sld [smem:[#allocation5 + $0x6]]
      %s216 = sld [smem:[#allocation5 + $0x7]]
      %s217 = sld [smem:[#allocation5 + $0x8]]
      %s218 = sld [smem:[#allocation5 + $0x9]]
      %s219 = sld [smem:[#allocation5 + $0xa]]
      %s220 = sld [smem:[#allocation5 + $0xb]]
      %s221 = sld [smem:[#allocation5 + $0xc]]
      %s222 = sld [smem:[#allocation5 + $0xd]]
      %s223 = sld [smem:[#allocation5 + $0xe]]
      %s224 = sld [smem:[#allocation5 + $0xf]]
      %s225 = sld [smem:[#allocation5 + $0x10]]
      %s226 = sld [smem:[#allocation5 + $0x11]]
      %s227 = sld [smem:[#allocation5 + $0x12]]
      %s228 = sld [smem:[#allocation5 + $0x13]]
      %s229 = sld [smem:[#allocation5 + $0x14]]
      %s230 = sld [smem:[#allocation5 + $0x15]]
      %s231 = sld [smem:[#allocation5 + $0x16]]
      %s232 = sld [smem:[#allocation5 + $0x17]]
      %s233 = sld [smem:[#allocation5 + $0x18]]
      %s234 = sld [smem:[#allocation5 + $0x19]]
      %s235 = sld [smem:[#allocation5 + $0x1a]]
      %s236 = sld [smem:[#allocation5 + $0x1b]]
      %s237 = sld [smem:[#allocation5 + $0x1c]]
      %s238 = sld [smem:[#allocation5 + $0x1d]]
      %s239 = sld [smem:[#allocation5 + $0x1e]]
      %s240 = sld [smem:[#allocation5 + $0x1f]]
      %s241 = sld [smem:[#allocation5 + $0x20]]
      %s242 = sld [smem:[#allocation5 + $0x21]]
      %s243 = sld [smem:[#allocation5 + $0x22]]
      %s244 = sld [smem:[#allocation5 + $0x23]]
      %s245 = sld [smem:[#allocation5 + $0x24]]
      %s246 = sld [smem:[#allocation5 + $0x25]]
      %s247 = sld [smem:[#allocation5 + $0x26]]
      %s248 = sld [smem:[#allocation5 + $0x27]]
      %s249 = sld [smem:[#allocation5 + $0x28]]
      %s250 = sld [smem:[#allocation5 + $0x29]]
      %s251 = sld [smem:[#allocation5 + $0x2a]]
      %s252 = sld [smem:[#allocation5 + $0x2b]]
      %s253 = sld [smem:[#allocation5 + $0x2c]]
      %s254 = sld [smem:[#allocation5 + $0x2d]]
      %s255 = sld [smem:[#allocation5 + $0x2e]]
      %s256 = sld [smem:[#allocation5 + $0x2f]]
      %s257 = sld [smem:[#allocation5 + $0x30]]
      %s258 = sld [smem:[#allocation5 + $0x31]]
      %s259 = sld [smem:[#allocation5 + $0x32]]
      %s260 = sld [smem:[#allocation5 + $0x33]]
      %s261 = sld [smem:[#allocation5 + $0x34]]
      %s262 = sld [smem:[#allocation5 + $0x35]]
      %s263 = sld [smem:[#allocation5 + $0x36]]
      %s264 = sld [smem:[#allocation5 + $0x37]]
      %s265 = sld [smem:[#allocation5 + $0x38]]
      %s266 = sld [smem:[#allocation5 + $0x39]]
      %s267 = sld [smem:[#allocation5 + $0x3a]]
      %s268 = sld [smem:[#allocation5 + $0x3b]]
      %s269 = sld [smem:[#allocation5 + $0x3c]]
      %s270 = sld [smem:[#allocation5 + $0x3d]]
      %s271 = sld [smem:[#allocation5 + $0x3e]]
      %s272 = sld [smem:[#allocation5 + $0x3f]]
      %s273 = sld [smem:[#allocation5 + $0x40]]
      %s274 = sld [smem:[#allocation5 + $0x41]]
      %s275 = sld [smem:[#allocation5 + $0x42]]
      %s276 = sld [smem:[#allocation5 + $0x43]]
      %s277 = sld [smem:[#allocation5 + $0x44]]
      %s278 = sld [smem:[#allocation5 + $0x45]]
      %s279 = sld [smem:[#allocation5 + $0x46]]
      %s280 = sld [smem:[#allocation5 + $0x47]]
      %s281 = sld [smem:[#allocation5 + $0x48]]
      %s282 = sld [smem:[#allocation5 + $0x49]]
      %s283 = sld [smem:[#allocation5 + $0x4a]]
      %s284 = sld [smem:[#allocation5 + $0x4b]]
      %s285 = sld [smem:[#allocation5 + $0x4c]]
      %s286 = sld [smem:[#allocation5 + $0x4d]]
      %s287 = sld [smem:[#allocation5 + $0x4e]]
      %s288 = sld [smem:[#allocation5 + $0x4f]]
      %s289 = sld [smem:[#allocation5 + $0x50]]
      %s290 = sld [smem:[#allocation5 + $0x51]]
      %s291 = sld [smem:[#allocation5 + $0x52]]
      %s292 = sld [smem:[#allocation5 + $0x53]]
      %s293 = sld [smem:[#allocation5 + $0x54]]
      %s294 = sld [smem:[#allocation5 + $0x55]]
      %s295 = sld [smem:[#allocation5 + $0x56]]
      %s296 = sld [smem:[#allocation5 + $0x57]]
      %s297 = sld [smem:[#allocation5 + $0x58]]
      %s298 = sld [smem:[#allocation5 + $0x59]]
      %s299 = sld [smem:[#allocation5 + $0x5a]]
      %s300 = sld [smem:[#allocation5 + $0x5b]]
      %s301 = sld [smem:[#allocation5 + $0x5c]]
      %s302 = sld [smem:[#allocation5 + $0x5d]]
      %s303 = sld [smem:[#allocation5 + $0x5e]]
      %s304 = sld [smem:[#allocation5 + $0x5f]]
      %s305 = sld [smem:[#allocation5 + $0x60]]
      %s306 = sld [smem:[#allocation5 + $0x61]]
      %v307 = vld [vmem:[#allocation9] sm:$0x7f]
      %v308 = vld [vmem:[#allocation9 + $0x8] sm:$0x7f]
      %v309 = vld [vmem:[#allocation4] sm:$0x3f]
      %v310 = vstv %s209
      %v311 = vmul.f32 %v310, %v309
      %v312 = vstv %s216
      %v313 = vmul.f32 %v312, %v309
      %315 = vrot.lane.b32.xlu0 %v313, 112
      %v316 = vpop.permute.xlu0 %315
      %v317 = vrot.slane %v316, 2
      %vm318 = vcmask 916480
      %v319 = vsel %vm318, %v316, %v317
      %v321 = vadd.f32 %v311, %v319
      %v322 = vstv %s223
      %v323 = vmul.f32 %v322, %v309
      %325 = vrot.lane.b32.xlu0 %v323, 96
      %v326 = vpop.permute.xlu0 %325
      %v327 = vrot.slane %v326, 2
      %vm328 = vcmask 785408
      %v329 = vsel %vm328, %v326, %v327
      %v331 = vadd.f32 %v321, %v329
      %v332 = vstv %s230
      %v333 = vmul.f32 %v332, %v309
      %335 = vrot.lane.b32.xlu0 %v333, 80
      %v336 = vpop.permute.xlu0 %335
      %v337 = vrot.slane %v336, 2
      %vm338 = vcmask 654336
      %v339 = vsel %vm338, %v336, %v337
      %v341 = vadd.f32 %v331, %v339
      %v342 = vld [vmem:[#allocation4 + $0x2] sm:$0x3f]
      %v343 = vstv %s237
      %v344 = vmul.f32 %v343, %v342
      %346 = vrot.lane.b32.xlu0 %v344, 64
      %v347 = vpop.permute.xlu0 %346
      %v348 = vrot.slane %v347, 6
      %vm349 = vcmask 523264
      %v350 = vsel %vm349, %v348, %v347
      %v352 = vadd.f32 %v341, %v350
      %v353 = vstv %s244
      %v354 = vmul.f32 %v353, %v342
      %356 = vrot.lane.b32.xlu0 %v354, 48
      %v357 = vpop.permute.xlu0 %356
      %v358 = vrot.slane %v357, 6
      %vm359 = vcmask 392192
      %v360 = vsel %vm359, %v358, %v357
      %v362 = vadd.f32 %v352, %v360
      %v363 = vstv %s251
      %v364 = vmul.f32 %v363, %v342
      %366 = vrot.lane.b32.xlu0 %v364, 32
      %v367 = vpop.permute.xlu0 %366
      %v368 = vrot.slane %v367, 6
      %vm369 = vcmask 261120
      %v370 = vsel %vm369, %v368, %v367
      %v372 = vadd.f32 %v362, %v370
      %v373 = vlaneseq
      %v374 = vshrl.u32 %v373, 7
      %v375 = vsub.s32 0, %v374
      %v376 = vrot.slane %v307, %v375
      %v377 = vlaneseq
      %v378 = vshrl.u32 %v377, 7
      %v379 = vsub.s32 0, %v378
      %v380 = vrot.slane %v308, %v379
      %v383 = vcombine.low %v376, %v380
      %v385 = vunpack.c.l.s4 1983009808
      %v386 = vunpack.c.0.s8 %v385
      %v387 = vlaneseq
      %v388 = vshrl.u32 %v387, 7
      %v389 = vsub.s32 %v386, %v388
      %v390 = vrot.slane %v383, %v389
      %391 = vrot.lane.b32.xlu0 %v390, 77
      %v392 = vpop.permute.xlu0 %391
      %v393 = vrot.slane %v392, 6
      %vm394 = vcmask 629760
      %v395 = vsel %vm394, %v393, %v392
      %v397 = vmul.f32 %v372, %v395
      %v398 = vadd.f32 %v397, 0.0
      %v399 = vstv %s210
      %v400 = vmul.f32 %v399, %v309
      %v401 = vstv %s217
      %v402 = vmul.f32 %v401, %v309
      %404 = vrot.lane.b32.xlu0 %v402, 112
      %v405 = vpop.permute.xlu0 %404
      %v406 = vrot.slane %v405, 2
      %v407 = vsel %vm318, %v405, %v406
      %v409 = vadd.f32 %v400, %v407
      %v410 = vstv %s224
      %v411 = vmul.f32 %v410, %v309
      %413 = vrot.lane.b32.xlu0 %v411, 96
      %v414 = vpop.permute.xlu0 %413
      %v415 = vrot.slane %v414, 2
      %v416 = vsel %vm328, %v414, %v415
      %v418 = vadd.f32 %v409, %v416
      %v419 = vstv %s231
      %v420 = vmul.f32 %v419, %v309
      %422 = vrot.lane.b32.xlu0 %v420, 80
      %v423 = vpop.permute.xlu0 %422
      %v424 = vrot.slane %v423, 2
      %v425 = vsel %vm338, %v423, %v424
      %v427 = vadd.f32 %v418, %v425
      %v428 = vstv %s238
      %v429 = vmul.f32 %v428, %v342
      %431 = vrot.lane.b32.xlu0 %v429, 64
      %v432 = vpop.permute.xlu0 %431
      %v433 = vrot.slane %v432, 6
      %v434 = vsel %vm349, %v433, %v432
      %v436 = vadd.f32 %v427, %v434
      %v437 = vstv %s245
      %v438 = vmul.f32 %v437, %v342
      %440 = vrot.lane.b32.xlu0 %v438, 48
      %v441 = vpop.permute.xlu0 %440
      %v442 = vrot.slane %v441, 6
      %v443 = vsel %vm359, %v442, %v441
      %v445 = vadd.f32 %v436, %v443
      %v446 = vstv %s252
      %v447 = vmul.f32 %v446, %v342
      %449 = vrot.lane.b32.xlu0 %v447, 32
      %v450 = vpop.permute.xlu0 %449
      %v451 = vrot.slane %v450, 6
      %v452 = vsel %vm369, %v451, %v450
      %v454 = vadd.f32 %v445, %v452
      %v455 = vlaneseq
      %v456 = vshrl.u32 %v455, 7
      %v457 = vsub.s32 1, %v456
      %v458 = vrot.slane %v307, %v457
      %v459 = vlaneseq
      %v460 = vshrl.u32 %v459, 7
      %v461 = vsub.s32 1, %v460
      %v462 = vrot.slane %v308, %v461
      %v465 = vcombine.low %v458, %v462
      %v467 = vunpack.c.l.s4 1983009808
      %v468 = vunpack.c.0.s8 %v467
      %v469 = vlaneseq
      %v470 = vshrl.u32 %v469, 7
      %v471 = vsub.s32 %v468, %v470
      %v472 = vrot.slane %v465, %v471
      %473 = vrot.lane.b32.xlu0 %v472, 78
      %v474 = vpop.permute.xlu0 %473
      %v475 = vrot.slane %v474, 6
      %vm476 = vcmask 637952
      %v477 = vsel %vm476, %v475, %v474
      %v479 = vmul.f32 %v454, %v477
      %481 = vrot.lane.b32.xlu0 %v479, 127
      %v482 = vpop.permute.xlu0 %481
      %v483 = vrot.slane %v482, 2
      %vm484 = vcmask 1039360
      %v485 = vsel %vm484, %v482, %v483
      %v487 = vadd.f32 %v398, %v485
      %v488 = vstv %s211
      %v489 = vmul.f32 %v488, %v309
      %v490 = vstv %s218
      %v491 = vmul.f32 %v490, %v309
      %493 = vrot.lane.b32.xlu0 %v491, 112
      %v494 = vpop.permute.xlu0 %493
      %v495 = vrot.slane %v494, 2
      %v496 = vsel %vm318, %v494, %v495
      %v498 = vadd.f32 %v489, %v496
      %v499 = vstv %s225
      %v500 = vmul.f32 %v499, %v309
      %502 = vrot.lane.b32.xlu0 %v500, 96
      %v503 = vpop.permute.xlu0 %502
      %v504 = vrot.slane %v503, 2
      %v505 = vsel %vm328, %v503, %v504
      %v507 = vadd.f32 %v498, %v505
      %v508 = vstv %s232
      %v509 = vmul.f32 %v508, %v309
      %511 = vrot.lane.b32.xlu0 %v509, 80
      %v512 = vpop.permute.xlu0 %511
      %v513 = vrot.slane %v512, 2
      %v514 = vsel %vm338, %v512, %v513
      %v516 = vadd.f32 %v507, %v514
      %v517 = vstv %s239
      %v518 = vmul.f32 %v517, %v342
      %520 = vrot.lane.b32.xlu0 %v518, 64
      %v521 = vpop.permute.xlu0 %520
      %v522 = vrot.slane %v521, 6
      %v523 = vsel %vm349, %v522, %v521
      %v525 = vadd.f32 %v516, %v523
      %v526 = vstv %s246
      %v527 = vmul.f32 %v526, %v342
      %529 = vrot.lane.b32.xlu0 %v527, 48
      %v530 = vpop.permute.xlu0 %529
      %v531 = vrot.slane %v530, 6
      %v532 = vsel %vm359, %v531, %v530
      %v534 = vadd.f32 %v525, %v532
      %v535 = vstv %s253
      %v536 = vmul.f32 %v535, %v342
      %538 = vrot.lane.b32.xlu0 %v536, 32
      %v539 = vpop.permute.xlu0 %538
      %v540 = vrot.slane %v539, 6
      %v541 = vsel %vm369, %v540, %v539
      %v543 = vadd.f32 %v534, %v541
      %v544 = vlaneseq
      %v545 = vshrl.u32 %v544, 7
      %v546 = vsub.s32 2, %v545
      %v547 = vrot.slane %v307, %v546
      %v548 = vlaneseq
      %v549 = vshrl.u32 %v548, 7
      %v550 = vsub.s32 2, %v549
      %v551 = vrot.slane %v308, %v550
      %v554 = vcombine.low %v547, %v551
      %v556 = vunpack.c.l.s4 1983009808
      %v557 = vunpack.c.0.s8 %v556
      %v558 = vlaneseq
      %v559 = vshrl.u32 %v558, 7
      %v560 = vsub.s32 %v557, %v559
      %v561 = vrot.slane %v554, %v560
      %562 = vrot.lane.b32.xlu0 %v561, 79
      %v563 = vpop.permute.xlu0 %562
      %v564 = vrot.slane %v563, 6
      %vm565 = vcmask 646144
      %v566 = vsel %vm565, %v564, %v563
      %v568 = vmul.f32 %v543, %v566
      %570 = vrot.lane.b32.xlu0 %v568, 126
      %v571 = vpop.permute.xlu0 %570
      %v572 = vrot.slane %v571, 2
      %vm573 = vcmask 1031168
      %v574 = vsel %vm573, %v571, %v572
      %v576 = vadd.f32 %v487, %v574
      %v577 = vstv %s212
      %v578 = vmul.f32 %v577, %v309
      %v579 = vstv %s219
      %v580 = vmul.f32 %v579, %v309
      %582 = vrot.lane.b32.xlu0 %v580, 112
      %v583 = vpop.permute.xlu0 %582
      %v584 = vrot.slane %v583, 2
      %v585 = vsel %vm318, %v583, %v584
      %v587 = vadd.f32 %v578, %v585
      %v588 = vstv %s226
      %v589 = vmul.f32 %v588, %v309
      %591 = vrot.lane.b32.xlu0 %v589, 96
      %v592 = vpop.permute.xlu0 %591
      %v593 = vrot.slane %v592, 2
      %v594 = vsel %vm328, %v592, %v593
      %v596 = vadd.f32 %v587, %v594
      %v597 = vld [vmem:[#allocation4 + $0x2] sm:$0xf]
      %v598 = vstv %s233
      %v599 = vmul.f32 %v598, %v597
      %601 = vrot.lane.b32.xlu0 %v599, 80
      %v602 = vpop.permute.xlu0 %601
      %v603 = vrot.slane %v602, 6
      %v604 = vsel %vm338, %v603, %v602
      %v606 = vadd.f32 %v596, %v604
      %v607 = vstv %s240
      %v608 = vmul.f32 %v607, %v342
      %610 = vrot.lane.b32.xlu0 %v608, 64
      %v611 = vpop.permute.xlu0 %610
      %v612 = vrot.slane %v611, 6
      %v613 = vsel %vm349, %v612, %v611
      %v615 = vadd.f32 %v606, %v613
      %v616 = vstv %s247
      %v617 = vmul.f32 %v616, %v342
      %619 = vrot.lane.b32.xlu0 %v617, 48
      %v620 = vpop.permute.xlu0 %619
      %v621 = vrot.slane %v620, 6
      %v622 = vsel %vm359, %v621, %v620
      %v624 = vadd.f32 %v615, %v622
      %v625 = vstv %s254
      %v626 = vmul.f32 %v625, %v342
      %628 = vrot.lane.b32.xlu0 %v626, 32
      %v629 = vpop.permute.xlu0 %628
      %v630 = vrot.slane %v629, 6
      %v631 = vsel %vm369, %v630, %v629
      %v633 = vadd.f32 %v624, %v631
      %635 = vrot.lane.b32.xlu0 %v633, 125
      %v636 = vpop.permute.xlu0 %635
      %v637 = vrot.slane %v636, 2
      %vm638 = vcmask 1022976
      %v639 = vsel %vm638, %v636, %v637
      %v641 = vadd.f32 %v576, %v639
      %v642 = vstv %s213
      %v643 = vmul.f32 %v642, %v309
      %v644 = vstv %s220
      %v645 = vmul.f32 %v644, %v309
      %647 = vrot.lane.b32.xlu0 %v645, 112
      %v648 = vpop.permute.xlu0 %647
      %v649 = vrot.slane %v648, 2
      %v650 = vsel %vm318, %v648, %v649
      %v652 = vadd.f32 %v643, %v650
      %v653 = vstv %s227
      %v654 = vmul.f32 %v653, %v309
      %656 = vrot.lane.b32.xlu0 %v654, 96
      %v657 = vpop.permute.xlu0 %656
      %v658 = vrot.slane %v657, 2
      %v659 = vsel %vm328, %v657, %v658
      %v661 = vadd.f32 %v652, %v659
      %v662 = vstv %s234
      %v663 = vmul.f32 %v662, %v342
      %665 = vrot.lane.b32.xlu0 %v663, 80
      %v666 = vpop.permute.xlu0 %665
      %v667 = vrot.slane %v666, 6
      %v668 = vsel %vm338, %v667, %v666
      %v670 = vadd.f32 %v661, %v668
      %v671 = vstv %s241
      %v672 = vmul.f32 %v671, %v342
      %674 = vrot.lane.b32.xlu0 %v672, 64
      %v675 = vpop.permute.xlu0 %674
      %v676 = vrot.slane %v675, 6
      %v677 = vsel %vm349, %v676, %v675
      %v679 = vadd.f32 %v670, %v677
      %v680 = vstv %s248
      %v681 = vmul.f32 %v680, %v342
      %683 = vrot.lane.b32.xlu0 %v681, 48
      %v684 = vpop.permute.xlu0 %683
      %v685 = vrot.slane %v684, 6
      %v686 = vsel %vm359, %v685, %v684
      %v688 = vadd.f32 %v679, %v686
      %v689 = vstv %s255
      %v690 = vmul.f32 %v689, %v342
      %692 = vrot.lane.b32.xlu0 %v690, 32
      %v693 = vpop.permute.xlu0 %692
      %v694 = vrot.slane %v693, 6
      %v695 = vsel %vm369, %v694, %v693
      %v697 = vadd.f32 %v688, %v695
      %v698 = vlaneseq
      %v699 = vshrl.u32 %v698, 7
      %v700 = vsub.s32 4, %v699
      %v701 = vrot.slane %v307, %v700
      %v702 = vlaneseq
      %v703 = vshrl.u32 %v702, 7
      %v704 = vsub.s32 4, %v703
      %v705 = vrot.slane %v308, %v704
      %v708 = vcombine.low %v701, %v705
      %v710 = vunpack.c.l.s4 1983009808
      %v711 = vunpack.c.0.s8 %v710
      %v712 = vlaneseq
      %v713 = vshrl.u32 %v712, 7
      %v714 = vsub.s32 %v711, %v713
      %v715 = vrot.slane %v708, %v714
      %716 = vrot.lane.b32.xlu0 %v715, 81
      %v717 = vpop.permute.xlu0 %716
      %v718 = vrot.slane %v717, 6
      %vm719 = vcmask 662528
      %v720 = vsel %vm719, %v718, %v717
      %v722 = vmul.f32 %v697, %v720
      %724 = vrot.lane.b32.xlu0 %v722, 124
      %v725 = vpop.permute.xlu0 %724
      %v726 = vrot.slane %v725, 2
      %vm727 = vcmask 1014784
      %v728 = vsel %vm727, %v725, %v726
      %v730 = vadd.f32 %v641, %v728
      %v731 = vstv %s214
      %v732 = vmul.f32 %v731, %v309
      %v733 = vstv %s221
      %v734 = vmul.f32 %v733, %v309
      %736 = vrot.lane.b32.xlu0 %v734, 112
      %v737 = vpop.permute.xlu0 %736
      %v738 = vrot.slane %v737, 2
      %v739 = vsel %vm318, %v737, %v738
      %v741 = vadd.f32 %v732, %v739
      %v742 = vstv %s228
      %v743 = vmul.f32 %v742, %v309
      %745 = vrot.lane.b32.xlu0 %v743, 96
      %v746 = vpop.permute.xlu0 %745
      %v747 = vrot.slane %v746, 2
      %v748 = vsel %vm328, %v746, %v747
      %v750 = vadd.f32 %v741, %v748
      %v751 = vstv %s235
      %v752 = vmul.f32 %v751, %v342
      %754 = vrot.lane.b32.xlu0 %v752, 80
      %v755 = vpop.permute.xlu0 %754
      %v756 = vrot.slane %v755, 6
      %v757 = vsel %vm338, %v756, %v755
      %v759 = vadd.f32 %v750, %v757
      %v760 = vstv %s242
      %v761 = vmul.f32 %v760, %v342
      %763 = vrot.lane.b32.xlu0 %v761, 64
      %v764 = vpop.permute.xlu0 %763
      %v765 = vrot.slane %v764, 6
      %v766 = vsel %vm349, %v765, %v764
      %v768 = vadd.f32 %v759, %v766
      %v769 = vstv %s249
      %v770 = vmul.f32 %v769, %v342
      %772 = vrot.lane.b32.xlu0 %v770, 48
      %v773 = vpop.permute.xlu0 %772
      %v774 = vrot.slane %v773, 6
      %v775 = vsel %vm359, %v774, %v773
      %v777 = vadd.f32 %v768, %v775
      %v778 = vstv %s256
      %v779 = vmul.f32 %v778, %v342
      %781 = vrot.lane.b32.xlu0 %v779, 32
      %v782 = vpop.permute.xlu0 %781
      %v783 = vrot.slane %v782, 6
      %v784 = vsel %vm369, %v783, %v782
      %v786 = vadd.f32 %v777, %v784
      %v787 = vlaneseq
      %v788 = vshrl.u32 %v787, 7
      %v789 = vsub.s32 5, %v788
      %v790 = vrot.slane %v307, %v789
      %v791 = vlaneseq
      %v792 = vshrl.u32 %v791, 7
      %v793 = vsub.s32 5, %v792
      %v794 = vrot.slane %v308, %v793
      %v797 = vcombine.low %v790, %v794
      %v799 = vunpack.c.l.s4 1983009808
      %v800 = vunpack.c.0.s8 %v799
      %v801 = vlaneseq
      %v802 = vshrl.u32 %v801, 7
      %v803 = vsub.s32 %v800, %v802
      %v804 = vrot.slane %v797, %v803
      %805 = vrot.lane.b32.xlu0 %v804, 82
      %v806 = vpop.permute.xlu0 %805
      %v807 = vrot.slane %v806, 6
      %vm808 = vcmask 670720
      %v809 = vsel %vm808, %v807, %v806
      %v811 = vmul.f32 %v786, %v809
      %813 = vrot.lane.b32.xlu0 %v811, 123
      %v814 = vpop.permute.xlu0 %813
      %v815 = vrot.slane %v814, 2
      %vm816 = vcmask 1006592
      %v817 = vsel %vm816, %v814, %v815
      %v819 = vadd.f32 %v730, %v817
      %v820 = vstv %s215
      %v821 = vmul.f32 %v820, %v309
      %v822 = vstv %s222
      %v823 = vmul.f32 %v822, %v309
      %825 = vrot.lane.b32.xlu0 %v823, 112
      %v826 = vpop.permute.xlu0 %825
      %v827 = vrot.slane %v826, 2
      %v828 = vsel %vm318, %v826, %v827
      %v830 = vadd.f32 %v821, %v828
      %v831 = vstv %s229
      %v832 = vmul.f32 %v831, %v309
      %834 = vrot.lane.b32.xlu0 %v832, 96
      %v835 = vpop.permute.xlu0 %834
      %v836 = vrot.slane %v835, 2
      %v837 = vsel %vm328, %v835, %v836
      %v839 = vadd.f32 %v830, %v837
      %v840 = vstv %s236
      %v841 = vmul.f32 %v840, %v342
      %843 = vrot.lane.b32.xlu0 %v841, 80
      %v844 = vpop.permute.xlu0 %843
      %v845 = vrot.slane %v844, 6
      %v846 = vsel %vm338, %v845, %v844
      %v848 = vadd.f32 %v839, %v846
      %v849 = vstv %s243
      %v850 = vmul.f32 %v849, %v342
      %852 = vrot.lane.b32.xlu0 %v850, 64
      %v853 = vpop.permute.xlu0 %852
      %v854 = vrot.slane %v853, 6
      %v855 = vsel %vm349, %v854, %v853
      %v857 = vadd.f32 %v848, %v855
      %v858 = vstv %s250
      %v859 = vmul.f32 %v858, %v342
      %861 = vrot.lane.b32.xlu0 %v859, 48
      %v862 = vpop.permute.xlu0 %861
      %v863 = vrot.slane %v862, 6
      %v864 = vsel %vm359, %v863, %v862
      %v866 = vadd.f32 %v857, %v864
      %v867 = vstv %s257
      %v868 = vmul.f32 %v867, %v342
      %870 = vrot.lane.b32.xlu0 %v868, 32
      %v871 = vpop.permute.xlu0 %870
      %v872 = vrot.slane %v871, 6
      %v873 = vsel %vm369, %v872, %v871
      %v875 = vadd.f32 %v866, %v873
      %v876 = vlaneseq
      %v877 = vshrl.u32 %v876, 7
      %v878 = vsub.s32 6, %v877
      %v879 = vrot.slane %v307, %v878
      %v880 = vlaneseq
      %v881 = vshrl.u32 %v880, 7
      %v882 = vsub.s32 6, %v881
      %v883 = vrot.slane %v308, %v882
      %v886 = vcombine.low %v879, %v883
      %v888 = vunpack.c.l.s4 1983009808
      %v889 = vunpack.c.0.s8 %v888
      %v890 = vlaneseq
      %v891 = vshrl.u32 %v890, 7
      %v892 = vsub.s32 %v889, %v891
      %v893 = vrot.slane %v886, %v892
      %894 = vrot.lane.b32.xlu0 %v893, 83
      %v895 = vpop.permute.xlu0 %894
      %v896 = vrot.slane %v895, 6
      %vm897 = vcmask 678912
      %v898 = vsel %vm897, %v896, %v895
      %v900 = vmul.f32 %v875, %v898
      %902 = vrot.lane.b32.xlu0 %v900, 122
      %v903 = vpop.permute.xlu0 %902
      %v904 = vrot.slane %v903, 2
      %vm905 = vcmask 998400
      %v906 = vsel %vm905, %v903, %v904
      %v908 = vadd.f32 %v819, %v906
      %v909 = vld [vmem:[%s207] sm:$0x3f]
      %v910 = vstv %s258
      %v911 = vmul.f32 %v910, %v909
      %v912 = vstv %s265
      %v913 = vmul.f32 %v912, %v909
      %915 = vrot.lane.b32.xlu0 %v913, 112
      %v916 = vpop.permute.xlu0 %915
      %v917 = vrot.slane %v916, 2
      %v918 = vsel %vm318, %v916, %v917
      %v920 = vadd.f32 %v911, %v918
      %v921 = vstv %s272
      %v922 = vmul.f32 %v921, %v909
      %924 = vrot.lane.b32.xlu0 %v922, 96
      %v925 = vpop.permute.xlu0 %924
      %v926 = vrot.slane %v925, 2
      %v927 = vsel %vm328, %v925, %v926
      %v929 = vadd.f32 %v920, %v927
      %v930 = vstv %s279
      %v931 = vmul.f32 %v930, %v909
      %933 = vrot.lane.b32.xlu0 %v931, 80
      %v934 = vpop.permute.xlu0 %933
      %v935 = vrot.slane %v934, 2
      %v936 = vsel %vm338, %v934, %v935
      %v938 = vadd.f32 %v929, %v936
      %v939 = vld [vmem:[%s207 + $0x2] sm:$0x3f]
      %v940 = vstv %s286
      %v941 = vmul.f32 %v940, %v939
      %943 = vrot.lane.b32.xlu0 %v941, 64
      %v944 = vpop.permute.xlu0 %943
      %v945 = vrot.slane %v944, 6
      %v946 = vsel %vm349, %v945, %v944
      %v948 = vadd.f32 %v938, %v946
      %v949 = vstv %s293
      %v950 = vmul.f32 %v949, %v939
      %952 = vrot.lane.b32.xlu0 %v950, 48
      %v953 = vpop.permute.xlu0 %952
      %v954 = vrot.slane %v953, 6
      %v955 = vsel %vm359, %v954, %v953
      %v957 = vadd.f32 %v948, %v955
      %v958 = vstv %s300
      %v959 = vmul.f32 %v958, %v939
      %961 = vrot.lane.b32.xlu0 %v959, 32
      %v962 = vpop.permute.xlu0 %961
      %v963 = vrot.slane %v962, 6
      %v964 = vsel %vm369, %v963, %v962
      %v966 = vadd.f32 %v957, %v964
      %v967 = vmul.f32 %v966, %v395
      %v968 = vadd.f32 %v908, %v967
      %v969 = vstv %s259
      %v970 = vmul.f32 %v969, %v909
      %v971 = vstv %s266
      %v972 = vmul.f32 %v971, %v909
      %974 = vrot.lane.b32.xlu0 %v972, 112
      %v975 = vpop.permute.xlu0 %974
      %v976 = vrot.slane %v975, 2
      %v977 = vsel %vm318, %v975, %v976
      %v979 = vadd.f32 %v970, %v977
      %v980 = vstv %s273
      %v981 = vmul.f32 %v980, %v909
      %983 = vrot.lane.b32.xlu0 %v981, 96
      %v984 = vpop.permute.xlu0 %983
      %v985 = vrot.slane %v984, 2
      %v986 = vsel %vm328, %v984, %v985
      %v988 = vadd.f32 %v979, %v986
      %v989 = vstv %s280
      %v990 = vmul.f32 %v989, %v909
      %992 = vrot.lane.b32.xlu0 %v990, 80
      %v993 = vpop.permute.xlu0 %992
      %v994 = vrot.slane %v993, 2
      %v995 = vsel %vm338, %v993, %v994
      %v997 = vadd.f32 %v988, %v995
      %v998 = vstv %s287
      %v999 = vmul.f32 %v998, %v939
      %1001 = vrot.lane.b32.xlu0 %v999, 64
      %v1002 = vpop.permute.xlu0 %1001
      %v1003 = vrot.slane %v1002, 6
      %v1004 = vsel %vm349, %v1003, %v1002
      %v1006 = vadd.f32 %v997, %v1004
      %v1007 = vstv %s294
      %v1008 = vmul.f32 %v1007, %v939
      %1010 = vrot.lane.b32.xlu0 %v1008, 48
      %v1011 = vpop.permute.xlu0 %1010
      %v1012 = vrot.slane %v1011, 6
      %v1013 = vsel %vm359, %v1012, %v1011
      %v1015 = vadd.f32 %v1006, %v1013
      %v1016 = vstv %s301
      %v1017 = vmul.f32 %v1016, %v939
      %1019 = vrot.lane.b32.xlu0 %v1017, 32
      %v1020 = vpop.permute.xlu0 %1019
      %v1021 = vrot.slane %v1020, 6
      %v1022 = vsel %vm369, %v1021, %v1020
      %v1024 = vadd.f32 %v1015, %v1022
      %v1025 = vmul.f32 %v1024, %v477
      %1027 = vrot.lane.b32.xlu0 %v1025, 127
      %v1028 = vpop.permute.xlu0 %1027
      %v1029 = vrot.slane %v1028, 2
      %v1030 = vsel %vm484, %v1028, %v1029
      %v1032 = vadd.f32 %v968, %v1030
      %v1033 = vstv %s260
      %v1034 = vmul.f32 %v1033, %v909
      %v1035 = vstv %s267
      %v1036 = vmul.f32 %v1035, %v909
      %1038 = vrot.lane.b32.xlu0 %v1036, 112
      %v1039 = vpop.permute.xlu0 %1038
      %v1040 = vrot.slane %v1039, 2
      %v1041 = vsel %vm318, %v1039, %v1040
      %v1043 = vadd.f32 %v1034, %v1041
      %v1044 = vstv %s274
      %v1045 = vmul.f32 %v1044, %v909
      %1047 = vrot.lane.b32.xlu0 %v1045, 96
      %v1048 = vpop.permute.xlu0 %1047
      %v1049 = vrot.slane %v1048, 2
      %v1050 = vsel %vm328, %v1048, %v1049
      %v1052 = vadd.f32 %v1043, %v1050
      %v1053 = vstv %s281
      %v1054 = vmul.f32 %v1053, %v909
      %1056 = vrot.lane.b32.xlu0 %v1054, 80
      %v1057 = vpop.permute.xlu0 %1056
      %v1058 = vrot.slane %v1057, 2
      %v1059 = vsel %vm338, %v1057, %v1058
      %v1061 = vadd.f32 %v1052, %v1059
      %v1062 = vstv %s288
      %v1063 = vmul.f32 %v1062, %v939
      %1065 = vrot.lane.b32.xlu0 %v1063, 64
      %v1066 = vpop.permute.xlu0 %1065
      %v1067 = vrot.slane %v1066, 6
      %v1068 = vsel %vm349, %v1067, %v1066
      %v1070 = vadd.f32 %v1061, %v1068
      %v1071 = vstv %s295
      %v1072 = vmul.f32 %v1071, %v939
      %1074 = vrot.lane.b32.xlu0 %v1072, 48
      %v1075 = vpop.permute.xlu0 %1074
      %v1076 = vrot.slane %v1075, 6
      %v1077 = vsel %vm359, %v1076, %v1075
      %v1079 = vadd.f32 %v1070, %v1077
      %v1080 = vstv %s302
      %v1081 = vmul.f32 %v1080, %v939
      %1083 = vrot.lane.b32.xlu0 %v1081, 32
      %v1084 = vpop.permute.xlu0 %1083
      %v1085 = vrot.slane %v1084, 6
      %v1086 = vsel %vm369, %v1085, %v1084
      %v1088 = vadd.f32 %v1079, %v1086
      %v1089 = vmul.f32 %v1088, %v566
      %1091 = vrot.lane.b32.xlu0 %v1089, 126
      %v1092 = vpop.permute.xlu0 %1091
      %v1093 = vrot.slane %v1092, 2
      %v1094 = vsel %vm573, %v1092, %v1093
      %v1096 = vadd.f32 %v1032, %v1094
      %v1097 = vstv %s261
      %v1098 = vmul.f32 %v1097, %v909
      %v1099 = vstv %s268
      %v1100 = vmul.f32 %v1099, %v909
      %1102 = vrot.lane.b32.xlu0 %v1100, 112
      %v1103 = vpop.permute.xlu0 %1102
      %v1104 = vrot.slane %v1103, 2
      %v1105 = vsel %vm318, %v1103, %v1104
      %v1107 = vadd.f32 %v1098, %v1105
      %v1108 = vstv %s275
      %v1109 = vmul.f32 %v1108, %v909
      %1111 = vrot.lane.b32.xlu0 %v1109, 96
      %v1112 = vpop.permute.xlu0 %1111
      %v1113 = vrot.slane %v1112, 2
      %v1114 = vsel %vm328, %v1112, %v1113
      %v1116 = vadd.f32 %v1107, %v1114
      %v1117 = vld [vmem:[%s207 + $0x2] sm:$0xf]
      %v1118 = vstv %s282
      %v1119 = vmul.f32 %v1118, %v1117
      %1121 = vrot.lane.b32.xlu0 %v1119, 80
      %v1122 = vpop.permute.xlu0 %1121
      %v1123 = vrot.slane %v1122, 6
      %v1124 = vsel %vm338, %v1123, %v1122
      %v1126 = vadd.f32 %v1116, %v1124
      %v1127 = vstv %s289
      %v1128 = vmul.f32 %v1127, %v939
      %1130 = vrot.lane.b32.xlu0 %v1128, 64
      %v1131 = vpop.permute.xlu0 %1130
      %v1132 = vrot.slane %v1131, 6
      %v1133 = vsel %vm349, %v1132, %v1131
      %v1135 = vadd.f32 %v1126, %v1133
      %v1136 = vstv %s296
      %v1137 = vmul.f32 %v1136, %v939
      %1139 = vrot.lane.b32.xlu0 %v1137, 48
      %v1140 = vpop.permute.xlu0 %1139
      %v1141 = vrot.slane %v1140, 6
      %v1142 = vsel %vm359, %v1141, %v1140
      %v1144 = vadd.f32 %v1135, %v1142
      %v1145 = vstv %s303
      %v1146 = vmul.f32 %v1145, %v939
      %1148 = vrot.lane.b32.xlu0 %v1146, 32
      %v1149 = vpop.permute.xlu0 %1148
      %v1150 = vrot.slane %v1149, 6
      %v1151 = vsel %vm369, %v1150, %v1149
      %v1153 = vadd.f32 %v1144, %v1151
      %1155 = vrot.lane.b32.xlu0 %v1153, 125
      %v1156 = vpop.permute.xlu0 %1155
      %v1157 = vrot.slane %v1156, 2
      %v1158 = vsel %vm638, %v1156, %v1157
      %v1160 = vadd.f32 %v1096, %v1158
      %v1161 = vstv %s262
      %v1162 = vmul.f32 %v1161, %v909
      %v1163 = vstv %s269
      %v1164 = vmul.f32 %v1163, %v909
      %1166 = vrot.lane.b32.xlu0 %v1164, 112
      %v1167 = vpop.permute.xlu0 %1166
      %v1168 = vrot.slane %v1167, 2
      %v1169 = vsel %vm318, %v1167, %v1168
      %v1171 = vadd.f32 %v1162, %v1169
      %v1172 = vstv %s276
      %v1173 = vmul.f32 %v1172, %v909
      %1175 = vrot.lane.b32.xlu0 %v1173, 96
      %v1176 = vpop.permute.xlu0 %1175
      %v1177 = vrot.slane %v1176, 2
      %v1178 = vsel %vm328, %v1176, %v1177
      %v1180 = vadd.f32 %v1171, %v1178
      %v1181 = vstv %s283
      %v1182 = vmul.f32 %v1181, %v939
      %1184 = vrot.lane.b32.xlu0 %v1182, 80
      %v1185 = vpop.permute.xlu0 %1184
      %v1186 = vrot.slane %v1185, 6
      %v1187 = vsel %vm338, %v1186, %v1185
      %v1189 = vadd.f32 %v1180, %v1187
      %v1190 = vstv %s290
      %v1191 = vmul.f32 %v1190, %v939
      %1193 = vrot.lane.b32.xlu0 %v1191, 64
      %v1194 = vpop.permute.xlu0 %1193
      %v1195 = vrot.slane %v1194, 6
      %v1196 = vsel %vm349, %v1195, %v1194
      %v1198 = vadd.f32 %v1189, %v1196
      %v1199 = vstv %s297
      %v1200 = vmul.f32 %v1199, %v939
      %1202 = vrot.lane.b32.xlu0 %v1200, 48
      %v1203 = vpop.permute.xlu0 %1202
      %v1204 = vrot.slane %v1203, 6
      %v1205 = vsel %vm359, %v1204, %v1203
      %v1207 = vadd.f32 %v1198, %v1205
      %v1208 = vstv %s304
      %v1209 = vmul.f32 %v1208, %v939
      %1211 = vrot.lane.b32.xlu0 %v1209, 32
      %v1212 = vpop.permute.xlu0 %1211
      %v1213 = vrot.slane %v1212, 6
      %v1214 = vsel %vm369, %v1213, %v1212
      %v1216 = vadd.f32 %v1207, %v1214
      %v1217 = vmul.f32 %v1216, %v720
      %1219 = vrot.lane.b32.xlu0 %v1217, 124
      %v1220 = vpop.permute.xlu0 %1219
      %v1221 = vrot.slane %v1220, 2
      %v1222 = vsel %vm727, %v1220, %v1221
      %v1224 = vadd.f32 %v1160, %v1222
      %v1225 = vstv %s263
      %v1226 = vmul.f32 %v1225, %v909
      %v1227 = vstv %s270
      %v1228 = vmul.f32 %v1227, %v909
      %1230 = vrot.lane.b32.xlu0 %v1228, 112
      %v1231 = vpop.permute.xlu0 %1230
      %v1232 = vrot.slane %v1231, 2
      %v1233 = vsel %vm318, %v1231, %v1232
      %v1235 = vadd.f32 %v1226, %v1233
      %v1236 = vstv %s277
      %v1237 = vmul.f32 %v1236, %v909
      %1239 = vrot.lane.b32.xlu0 %v1237, 96
      %v1240 = vpop.permute.xlu0 %1239
      %v1241 = vrot.slane %v1240, 2
      %v1242 = vsel %vm328, %v1240, %v1241
      %v1244 = vadd.f32 %v1235, %v1242
      %v1245 = vstv %s284
      %v1246 = vmul.f32 %v1245, %v939
      %1248 = vrot.lane.b32.xlu0 %v1246, 80
      %v1249 = vpop.permute.xlu0 %1248
      %v1250 = vrot.slane %v1249, 6
      %v1251 = vsel %vm338, %v1250, %v1249
      %v1253 = vadd.f32 %v1244, %v1251
      %v1254 = vstv %s291
      %v1255 = vmul.f32 %v1254, %v939
      %1257 = vrot.lane.b32.xlu0 %v1255, 64
      %v1258 = vpop.permute.xlu0 %1257
      %v1259 = vrot.slane %v1258, 6
      %v1260 = vsel %vm349, %v1259, %v1258
      %v1262 = vadd.f32 %v1253, %v1260
      %v1263 = vstv %s298
      %v1264 = vmul.f32 %v1263, %v939
      %1266 = vrot.lane.b32.xlu0 %v1264, 48
      %v1267 = vpop.permute.xlu0 %1266
      %v1268 = vrot.slane %v1267, 6
      %v1269 = vsel %vm359, %v1268, %v1267
      %v1271 = vadd.f32 %v1262, %v1269
      %v1272 = vstv %s305
      %v1273 = vmul.f32 %v1272, %v939
      %1275 = vrot.lane.b32.xlu0 %v1273, 32
      %v1276 = vpop.permute.xlu0 %1275
      %v1277 = vrot.slane %v1276, 6
      %v1278 = vsel %vm369, %v1277, %v1276
      %v1280 = vadd.f32 %v1271, %v1278
      %v1281 = vmul.f32 %v1280, %v809
      %1283 = vrot.lane.b32.xlu0 %v1281, 123
      %v1284 = vpop.permute.xlu0 %1283
      %v1285 = vrot.slane %v1284, 2
      %v1286 = vsel %vm816, %v1284, %v1285
      %v1288 = vadd.f32 %v1224, %v1286
      %v1289 = vstv %s264
      %v1290 = vmul.f32 %v1289, %v909
      %v1291 = vstv %s271
      %v1292 = vmul.f32 %v1291, %v909
      %1294 = vrot.lane.b32.xlu0 %v1292, 112
      %v1295 = vpop.permute.xlu0 %1294
      %v1296 = vrot.slane %v1295, 2
      %v1297 = vsel %vm318, %v1295, %v1296
      %v1299 = vadd.f32 %v1290, %v1297
      %v1300 = vstv %s278
      %v1301 = vmul.f32 %v1300, %v909
      %1303 = vrot.lane.b32.xlu0 %v1301, 96
      %v1304 = vpop.permute.xlu0 %1303
      %v1305 = vrot.slane %v1304, 2
      %v1306 = vsel %vm328, %v1304, %v1305
      %v1308 = vadd.f32 %v1299, %v1306
      %v1309 = vstv %s285
      %v1310 = vmul.f32 %v1309, %v939
      %1312 = vrot.lane.b32.xlu0 %v1310, 80
      %v1313 = vpop.permute.xlu0 %1312
      %v1314 = vrot.slane %v1313, 6
      %v1315 = vsel %vm338, %v1314, %v1313
      %v1317 = vadd.f32 %v1308, %v1315
      %v1318 = vstv %s292
      %v1319 = vmul.f32 %v1318, %v939
      %1321 = vrot.lane.b32.xlu0 %v1319, 64
      %v1322 = vpop.permute.xlu0 %1321
      %v1323 = vrot.slane %v1322, 6
      %v1324 = vsel %vm349, %v1323, %v1322
      %v1326 = vadd.f32 %v1317, %v1324
      %v1327 = vstv %s299
      %v1328 = vmul.f32 %v1327, %v939
      %1330 = vrot.lane.b32.xlu0 %v1328, 48
      %v1331 = vpop.permute.xlu0 %1330
      %v1332 = vrot.slane %v1331, 6
      %v1333 = vsel %vm359, %v1332, %v1331
      %v1335 = vadd.f32 %v1326, %v1333
      %v1336 = vstv %s306
      %v1337 = vmul.f32 %v1336, %v939
      %1339 = vrot.lane.b32.xlu0 %v1337, 32
      %v1340 = vpop.permute.xlu0 %1339
      %v1341 = vrot.slane %v1340, 6
      %v1342 = vsel %vm369, %v1341, %v1340
      %v1344 = vadd.f32 %v1335, %v1342
      %v1345 = vmul.f32 %v1344, %v898
      %1347 = vrot.lane.b32.xlu0 %v1345, 122
      %v1348 = vpop.permute.xlu0 %1347
      %v1349 = vrot.slane %v1348, 2
      %v1350 = vsel %vm905, %v1348, %v1349
      %v1352 = vadd.f32 %v1288, %v1350
      %v1353 = vxor.u32 %v1352, 2147483648
      %v1354 = vmul.f32 %v1353, 1.442695
      %v1355 = vpow.pop %v1354
      %v1356 = vadd.f32 %v1355, 1.0
      %v1357 = vrcp.pop %v1356
      %v1358 = vmul.f32 1.0, %v1357
      %1360 = vrot.lane.b32.xlu0 %v1358, 51
      %v1361 = vpop.permute.xlu0 %1360
      %v1362 = vrot.slane %v1361, 2
      %vm1363 = vcmask 416768
      %v1364 = vsel %vm1363, %v1361, %v1362
      %1366 = vst [vmem:[#allocation12] sm:$0xf] %v1364
    $region33: #{tpu_custom_call.1} parent=1 // pred_fallthru
      _
    // Predicated region
    $region34: #{tpu_custom_call.1} parent=1 // pred_check
      _
    $region35: #{tpu_custom_call.1} parent=1 // pred_check_branch
      %1368 = sbr.rel (0) target = $region37
    $region36: #{tpu_custom_call.1} parent=1 // pred_region
      %s1370 = ssub.s32 64, 64
      %1371 = vsyncadd [#allocation7], %s1370
      %s1373 = sshll.u32 [#allocation12], 4
      %s1374 = int_to_ptr.vmem [resolvable:$true] %s1373
      %1376 = dma.vmem_to_hbm [thread:$0]  %s1374, 64, %s3, [#allocation7]
    $region37: #{tpu_custom_call.1} parent=1 // pred_fallthru
      _
    // Predicated region
    $region38: #{tpu_custom_call.1} parent=1 // pred_check
      _
    $region39: #{tpu_custom_call.1} parent=1 // pred_check_branch
      %1378 = sbr.rel (0) target = $region41
    $region40: #{tpu_custom_call.1} parent=1 // pred_region
      %1379 = dma.done [#allocation7], 64
    $region41: #{tpu_custom_call.1} parent=1 // pred_fallthru
      _
    %1380 = vsyncpa [#allocation6], 1
    %1381 = vsyncpa [#allocation11], 1
    %1382 = vsyncpa [#allocation7], 1
    %1383 = vsyncpa [#allocation8], 1

</llo_original>
